<compile_context>
chip_gen: v7x
topology: tpu7x:2x2x1
jax: 0.10.0
libtpu: 0.0.40
codegen_flags: <defaults>
</compile_context>

<pallas_src>
import functools

import jax
import jax.numpy as jnp
from jax.experimental import pallas as pl
from jax.experimental.pallas import tpu as pltpu  # noqa: F401  (not needed for this kernel)


def _fused_kernel(params_ref, x255_ref, w_ref, x249_ref, out_ref, *, eps, inv_p):
    # params_ref : (C, 3)   [:,0]=scale  [:,1]=gamma  [:,2]=beta
    # x255_ref   : (C, P)   input to be scaled (P = N*H*W true positions)
    # w_ref      : (C, C)   1x1 conv weight (C_out, C_in), no bias
    # x249_ref   : (C, P)   residual
    prm = params_ref[...]
    scale = prm[:, 0:1]
    gamma = prm[:, 1:2]
    beta = prm[:, 2:3]

    x = scale * x255_ref[...]                                         # operator.mul
    y = jnp.dot(w_ref[...], x, preferred_element_type=jnp.float32)    # 1x1 conv

    # Training-mode batch stats over the P valid lanes (Mosaic masks the
    # reduction to the true 196 positions; padded lanes never contribute).
    mean = jnp.sum(y, axis=1, keepdims=True) * inv_p
    yc = y - mean
    var = jnp.sum(yc * yc, axis=1, keepdims=True) * inv_p
    z = gamma * (yc * jax.lax.rsqrt(var + eps)) + beta                # BN affine

    out_ref[...] = jnp.maximum(x249_ref[...] + z, 0.0)                # add + ReLU


def fused_mul_conv_bn_add_relu(x260, x255, x249, w, gamma, beta, eps=1e-5):
    """Inputs in PyTorch NCHW; returns NCHW float32 output."""
    n, c, h, wd = x255.shape
    p = n * h * wd

    if n == 1:
        # Pure reshape (contiguous) -- no data movement.
        x255_f = x255.reshape(c, p).astype(jnp.float32)
        x249_f = x249.reshape(c, p).astype(jnp.float32)
    else:
        x255_f = jnp.transpose(x255, (1, 0, 2, 3)).reshape(c, p).astype(jnp.float32)
        x249_f = jnp.transpose(x249, (1, 0, 2, 3)).reshape(c, p).astype(jnp.float32)

    w2 = w.reshape(c, c).astype(jnp.float32)
    params = jnp.stack(
        [x260.reshape(c).astype(jnp.float32),
         gamma.reshape(c).astype(jnp.float32),
         beta.reshape(c).astype(jnp.float32)],
        axis=1)                                                        # (C, 3), ~4 KB

    out = pl.pallas_call(
        functools.partial(_fused_kernel, eps=float(eps), inv_p=1.0 / float(p)),
        out_shape=jax.ShapeDtypeStruct((c, p), jnp.float32),
        grid=(1,),
        in_specs=[
            pl.BlockSpec((c, 3), lambda i: (0, 0)),   # packed scale/gamma/beta
            pl.BlockSpec((c, p), lambda i: (0, 0)),   # x255
            pl.BlockSpec((c, c), lambda i: (0, 0)),   # weight
            pl.BlockSpec((c, p), lambda i: (0, 0)),   # residual
        ],
        out_specs=pl.BlockSpec((c, p), lambda i: (0, 0)),
    )(params, x255_f, w2, x249_f)

    if n == 1:
        return out.reshape(n, c, h, wd)
    return jnp.transpose(out.reshape(c, n, h, wd), (1, 0, 2, 3))


def _reference(x260, x255, x249, w, gamma, beta, eps=1e-5):
    x261 = x260 * x255
    x262 = jnp.einsum('oc,nchw->nohw', w.reshape(w.shape[0], w.shape[1]), x261)
    mean = jnp.mean(x262, axis=(0, 2, 3), keepdims=True)
    var = jnp.var(x262, axis=(0, 2, 3), keepdims=True)
    x263 = (x262 - mean) / jnp.sqrt(var + eps)
    x263 = gamma.reshape(1, -1, 1, 1) * x263 + beta.reshape(1, -1, 1, 1)
    return jnp.maximum(x249 + x263, 0.0)


if __name__ == "__main__":
    key = jax.random.PRNGKey(0)
    k1, k2, k3, k4 = jax.random.split(key, 4)

    N, C, H, W = 1, 336, 14, 14
    x249 = jax.random.normal(k1, (N, C, H, W), dtype=jnp.float32)
    x255 = jax.random.normal(k2, (N, C, H, W), dtype=jnp.float32)
    x260 = jax.random.normal(k3, (N, C, 1, 1), dtype=jnp.float32)

    # Deterministic parameter init (Conv2d weight ~ kaiming-ish scale; BN defaults).
    w = jax.random.normal(k4, (C, C, 1, 1), dtype=jnp.float32) * (1.0 / jnp.sqrt(C))
    gamma = jnp.ones((C,), dtype=jnp.float32)
    beta = jnp.zeros((C,), dtype=jnp.float32)

    out = fused_mul_conv_bn_add_relu(x260, x255, x249, w, gamma, beta)
    out = jax.block_until_ready(out)

    ref = _reference(x260, x255, x249, w, gamma, beta)
    assert out.shape == (N, C, H, W)
    assert jnp.allclose(out, ref, atol=1e-4, rtol=1e-4), "mismatch vs reference"

    print("KERNEL_OK")
</pallas_src>

<mosaic_0001>
module attributes {stable_mosaic.version = 11 : i64} {
  func.func @_fused_kernel(%arg0: i32, %arg1: memref<336x3xf32, #tpu.memory_space<vmem>>, %arg2: memref<336x196xf32, #tpu.memory_space<vmem>>, %arg3: memref<336x336xf32, #tpu.memory_space<vmem>>, %arg4: memref<336x196xf32, #tpu.memory_space<vmem>>, %arg5: memref<336x196xf32, #tpu.memory_space<vmem>>) attributes {dimension_semantics = [#tpu.dimension_semantics<arbitrary>], iteration_bounds = array<i64: 1>, scalar_prefetch = 0 : i64, scratch_operands = 0 : i64, tpu.core_type = #tpu.core_type<tc>, window_params = [{pipeline_mode = #tpu.pipeline_mode<synchronous>, transform_indices = @transform_0, window_bounds = array<i64: 336, 3>}, {pipeline_mode = #tpu.pipeline_mode<synchronous>, transform_indices = @transform_1, window_bounds = array<i64: 336, 196>}, {pipeline_mode = #tpu.pipeline_mode<synchronous>, transform_indices = @transform_2, window_bounds = array<i64: 336, 336>}, {pipeline_mode = #tpu.pipeline_mode<synchronous>, transform_indices = @transform_3, window_bounds = array<i64: 336, 196>}, {pipeline_mode = #tpu.pipeline_mode<synchronous>, transform_indices = @transform_4, window_bounds = array<i64: 336, 196>}]} {
    %c0 = arith.constant 0 : index
    %c0_0 = arith.constant 0 : index
    %0 = vector.load %arg1[%c0, %c0_0] : memref<336x3xf32, #tpu.memory_space<vmem>>, vector<336x3xf32>
    %1 = vector.extract_strided_slice %0 {offsets = [0, 0], sizes = [336, 1], strides = [1, 1]} : vector<336x3xf32> to vector<336x1xf32>
    %2 = vector.extract_strided_slice %0 {offsets = [0, 1], sizes = [336, 1], strides = [1, 1]} : vector<336x3xf32> to vector<336x1xf32>
    %3 = vector.extract_strided_slice %0 {offsets = [0, 2], sizes = [336, 1], strides = [1, 1]} : vector<336x3xf32> to vector<336x1xf32>
    %c0_1 = arith.constant 0 : index
    %c0_2 = arith.constant 0 : index
    %4 = vector.load %arg2[%c0_1, %c0_2] : memref<336x196xf32, #tpu.memory_space<vmem>>, vector<336x196xf32>
    %5 = vector.broadcast %1 : vector<336x1xf32> to vector<336x196xf32>
    %6 = arith.mulf %5, %4 : vector<336x196xf32>
    %c0_3 = arith.constant 0 : index
    %c0_4 = arith.constant 0 : index
    %7 = vector.load %arg3[%c0_3, %c0_4] : memref<336x336xf32, #tpu.memory_space<vmem>>, vector<336x336xf32>
    %cst = arith.constant dense<0.000000e+00> : vector<336x196xf32>
    %8 = tpu.matmul %7, %6, %cst {dimension_numbers = #tpu.dot_dimension_numbers<[1], [0], [0], [1], [0, 0, 1, 1], [], []>} : vector<336x336xf32>, vector<336x196xf32>, vector<336x196xf32> -> vector<336x196xf32>
    %cst_5 = arith.constant dense<0.000000e+00> : vector<336xf32>
    %9 = vector.multi_reduction <add>, %8, %cst_5 [1] : vector<336x196xf32> to vector<336xf32>
    %10 = vector.shape_cast %9 : vector<336xf32> to vector<336x1xf32>
    %cst_6 = arith.constant 0.00510204071 : f32
    %11 = vector.broadcast %cst_6 : f32 to vector<336x1xf32>
    %12 = arith.mulf %10, %11 : vector<336x1xf32>
    %13 = vector.broadcast %12 : vector<336x1xf32> to vector<336x196xf32>
    %14 = arith.subf %8, %13 : vector<336x196xf32>
    %15 = arith.mulf %14, %14 : vector<336x196xf32>
    %cst_7 = arith.constant dense<0.000000e+00> : vector<336xf32>
    %16 = vector.multi_reduction <add>, %15, %cst_7 [1] : vector<336x196xf32> to vector<336xf32>
    %17 = vector.shape_cast %16 : vector<336xf32> to vector<336x1xf32>
    %cst_8 = arith.constant 0.00510204071 : f32
    %18 = vector.broadcast %cst_8 : f32 to vector<336x1xf32>
    %19 = arith.mulf %17, %18 : vector<336x1xf32>
    %cst_9 = arith.constant 9.99999974E-6 : f32
    %20 = vector.broadcast %cst_9 : f32 to vector<336x1xf32>
    %21 = arith.addf %19, %20 : vector<336x1xf32>
    %22 = math.rsqrt %21 : vector<336x1xf32>
    %23 = vector.broadcast %22 : vector<336x1xf32> to vector<336x196xf32>
    %24 = arith.mulf %14, %23 : vector<336x196xf32>
    %25 = vector.broadcast %2 : vector<336x1xf32> to vector<336x196xf32>
    %26 = arith.mulf %25, %24 : vector<336x196xf32>
    %27 = vector.broadcast %3 : vector<336x1xf32> to vector<336x196xf32>
    %28 = arith.addf %26, %27 : vector<336x196xf32>
    %c0_10 = arith.constant 0 : index
    %c0_11 = arith.constant 0 : index
    %29 = vector.load %arg4[%c0_10, %c0_11] : memref<336x196xf32, #tpu.memory_space<vmem>>, vector<336x196xf32>
    %30 = arith.addf %29, %28 : vector<336x196xf32>
    %cst_12 = arith.constant 0.000000e+00 : f32
    %31 = vector.broadcast %cst_12 : f32 to vector<336x196xf32>
    %32 = arith.maximumf %30, %31 : vector<336x196xf32>
    %c0_13 = arith.constant 0 : index
    %c0_14 = arith.constant 0 : index
    %33 = vector.load %arg5[%c0_13, %c0_14] : memref<336x196xf32, #tpu.memory_space<vmem>>, vector<336x196xf32>
    tpu.vector_store %arg5[%c0_13, %c0_14], %32 {strides = array<i32>} : memref<336x196xf32, #tpu.memory_space<vmem>>, vector<336x196xf32>,
    return
  }
  func.func @transform_0(%arg0: i32) -> (i32, i32) {
    %c0_i32 = arith.constant 0 : i32
    %c0_i32_0 = arith.constant 0 : i32
    %c0_i32_1 = arith.constant 0 : i32
    return %c0_i32, %c0_i32_0 : i32, i32
  }
  func.func @transform_1(%arg0: i32) -> (i32, i32) {
    %c0_i32 = arith.constant 0 : i32
    %c0_i32_0 = arith.constant 0 : i32
    %c0_i32_1 = arith.constant 0 : i32
    return %c0_i32, %c0_i32_0 : i32, i32
  }
  func.func @transform_2(%arg0: i32) -> (i32, i32) {
    %c0_i32 = arith.constant 0 : i32
    %c0_i32_0 = arith.constant 0 : i32
    %c0_i32_1 = arith.constant 0 : i32
    return %c0_i32, %c0_i32_0 : i32, i32
  }
  func.func @transform_3(%arg0: i32) -> (i32, i32) {
    %c0_i32 = arith.constant 0 : i32
    %c0_i32_0 = arith.constant 0 : i32
    %c0_i32_1 = arith.constant 0 : i32
    return %c0_i32, %c0_i32_0 : i32, i32
  }
  func.func @transform_4(%arg0: i32) -> (i32, i32) {
    %c0_i32 = arith.constant 0 : i32
    %c0_i32_0 = arith.constant 0 : i32
    %c0_i32_1 = arith.constant 0 : i32
    return %c0_i32, %c0_i32_0 : i32, i32
  }
}

</mosaic_0001>

<llo_original>
// kernel: tpu_custom_call.1
$region0: #{tpu_custom_call.1}
  #allocation0 [shape = 'u32[]', space=smem, size = 0x4, offset = 0x4, fixed_abs, tag = 'smem constant byte address 0x4 - core index']
  #allocation1 [shape = 'u32[144,128]{1,0:T(1,128)}', space=vmem, size = 0x12000, scoped, tag = 'internal scratch']
  %s0 = inlined_call_operand.vmem [shape: f32[336,3], index: 0, kind: input, shape index: {}]
  %s1 = inlined_call_operand.vmem [shape: f32[336,196], index: 1, kind: input, shape index: {}]
  %s2 = inlined_call_operand.vmem [shape: f32[336,336], index: 2, kind: input, shape index: {}]
  %s3 = inlined_call_operand.vmem [shape: f32[336,196], index: 3, kind: input, shape index: {}]
  %s4 = inlined_call_operand.vmem [shape: f32[336,196], index: 4, kind: output, shape index: {}]
  %s5 = sld [smem:[#allocation0]]
  $region26: #{tpu_custom_call.1} parent=0
    _
  %s7 = ssub.s32 1, %s5
  %s8 = scalar_select 0, %s7, %s5
  // Predicated region
  $region2: #{tpu_custom_call.1} parent=0 // pred_check
    _
  $region3: #{tpu_custom_call.1} parent=0 // pred_check_branch
    %10 = sbr.rel (0) target = $region5
  $region4: #{tpu_custom_call.1} parent=0 // pred_region
    _
  $region5: #{tpu_custom_call.1} parent=0 // pred_fallthru
    _
  // Predicated region
  $region6: #{tpu_custom_call.1} parent=0 // pred_check
    _
  $region7: #{tpu_custom_call.1} parent=0 // pred_check_branch
    %12 = sbr.rel (0) target = $region9
  $region8: #{tpu_custom_call.1} parent=0 // pred_region
    _
  $region9: #{tpu_custom_call.1} parent=0 // pred_fallthru
    _
  // Predicated region
  $region10: #{tpu_custom_call.1} parent=0 // pred_check
    _
  $region11: #{tpu_custom_call.1} parent=0 // pred_check_branch
    %14 = sbr.rel (0) target = $region13
  $region12: #{tpu_custom_call.1} parent=0 // pred_region
    _
  $region13: #{tpu_custom_call.1} parent=0 // pred_fallthru
    _
  // Predicated region
  $region14: #{tpu_custom_call.1} parent=0 // pred_check
    _
  $region15: #{tpu_custom_call.1} parent=0 // pred_check_branch
    %16 = sbr.rel (0) target = $region17
  $region16: #{tpu_custom_call.1} parent=0 // pred_region
    _
  $region17: #{tpu_custom_call.1} parent=0 // pred_fallthru
    _
  %v17 = vld [vmem:[%s0] sm:$0xff]
  %v18 = vld [vmem:[%s0 + $0x8] sm:$0xff]
  %v19 = vld [vmem:[%s0 + $0x10] sm:$0xff]
  %v20 = vld [vmem:[%s0 + $0x18] sm:$0xff]
  %v21 = vld [vmem:[%s0 + $0x20] sm:$0xff]
  %v22 = vld [vmem:[%s0 + $0x28] sm:$0xff]
  %v23 = vld [vmem:[%s0 + $0x30] sm:$0xff]
  %v24 = vld [vmem:[%s0 + $0x38] sm:$0xff]
  %v25 = vld [vmem:[%s0 + $0x40] sm:$0xff]
  %v26 = vld [vmem:[%s0 + $0x48] sm:$0xff]
  %v27 = vld [vmem:[%s0 + $0x50] sm:$0xff]
  %v28 = vld [vmem:[%s0 + $0x58] sm:$0xff]
  %v29 = vld [vmem:[%s0 + $0x60] sm:$0xff]
  %v30 = vld [vmem:[%s0 + $0x68] sm:$0xff]
  %v31 = vld [vmem:[%s0 + $0x70] sm:$0xff]
  %v32 = vld [vmem:[%s0 + $0x78] sm:$0xff]
  %v33 = vld [vmem:[%s0 + $0x80] sm:$0xff]
  %v34 = vld [vmem:[%s0 + $0x88] sm:$0xff]
  %v35 = vld [vmem:[%s0 + $0x90] sm:$0xff]
  %v36 = vld [vmem:[%s0 + $0x98] sm:$0xff]
  %v37 = vld [vmem:[%s0 + $0xa0] sm:$0xff]
  %v38 = vld [vmem:[%s0 + $0xa8] sm:$0xff]
  %v39 = vld [vmem:[%s0 + $0xb0] sm:$0xff]
  %v40 = vld [vmem:[%s0 + $0xb8] sm:$0xff]
  %v41 = vld [vmem:[%s0 + $0xc0] sm:$0xff]
  %v42 = vld [vmem:[%s0 + $0xc8] sm:$0xff]
  %v43 = vld [vmem:[%s0 + $0xd0] sm:$0xff]
  %v44 = vld [vmem:[%s0 + $0xd8] sm:$0xff]
  %v45 = vld [vmem:[%s0 + $0xe0] sm:$0xff]
  %v46 = vld [vmem:[%s0 + $0xe8] sm:$0xff]
  %v47 = vld [vmem:[%s0 + $0xf0] sm:$0xff]
  %v48 = vld [vmem:[%s0 + $0xf8] sm:$0xff]
  %v49 = vld [vmem:[%s0 + $0x100] sm:$0xff]
  %v50 = vld [vmem:[%s0 + $0x108] sm:$0xff]
  %v51 = vld [vmem:[%s0 + $0x110] sm:$0xff]
  %v52 = vld [vmem:[%s0 + $0x118] sm:$0xff]
  %v53 = vld [vmem:[%s0 + $0x120] sm:$0xff]
  %v54 = vld [vmem:[%s0 + $0x128] sm:$0xff]
  %v55 = vld [vmem:[%s0 + $0x130] sm:$0xff]
  %v56 = vld [vmem:[%s0 + $0x138] sm:$0xff]
  %v57 = vld [vmem:[%s0 + $0x140] sm:$0xff]
  %v58 = vld [vmem:[%s0 + $0x148] sm:$0xff]
  %v59 = vld [vmem:[%s1] sm:$0xff]
  %v60 = vld [vmem:[%s1 + $0x8] sm:$0xff]
  %v61 = vld [vmem:[%s1 + $0x10] sm:$0xff]
  %v62 = vld [vmem:[%s1 + $0x18] sm:$0xff]
  %v63 = vld [vmem:[%s1 + $0x20] sm:$0xff]
  %v64 = vld [vmem:[%s1 + $0x28] sm:$0xff]
  %v65 = vld [vmem:[%s1 + $0x30] sm:$0xff]
  %v66 = vld [vmem:[%s1 + $0x38] sm:$0xff]
  %v67 = vld [vmem:[%s1 + $0x40] sm:$0xff]
  %v68 = vld [vmem:[%s1 + $0x48] sm:$0xff]
  %v69 = vld [vmem:[%s1 + $0x50] sm:$0xff]
  %v70 = vld [vmem:[%s1 + $0x58] sm:$0xff]
  %v71 = vld [vmem:[%s1 + $0x60] sm:$0xff]
  %v72 = vld [vmem:[%s1 + $0x68] sm:$0xff]
  %v73 = vld [vmem:[%s1 + $0x70] sm:$0xff]
  %v74 = vld [vmem:[%s1 + $0x78] sm:$0xff]
  %v75 = vld [vmem:[%s1 + $0x80] sm:$0xff]
  %v76 = vld [vmem:[%s1 + $0x88] sm:$0xff]
  %v77 = vld [vmem:[%s1 + $0x90] sm:$0xff]
  %v78 = vld [vmem:[%s1 + $0x98] sm:$0xff]
  %v79 = vld [vmem:[%s1 + $0xa0] sm:$0xff]
  %v80 = vld [vmem:[%s1 + $0xa8] sm:$0xff]
  %v81 = vld [vmem:[%s1 + $0xb0] sm:$0xff]
  %v82 = vld [vmem:[%s1 + $0xb8] sm:$0xff]
  %v83 = vld [vmem:[%s1 + $0xc0] sm:$0xff]
  %v84 = vld [vmem:[%s1 + $0xc8] sm:$0xff]
  %v85 = vld [vmem:[%s1 + $0xd0] sm:$0xff]
  %v86 = vld [vmem:[%s1 + $0xd8] sm:$0xff]
  %v87 = vld [vmem:[%s1 + $0xe0] sm:$0xff]
  %v88 = vld [vmem:[%s1 + $0xe8] sm:$0xff]
  %v89 = vld [vmem:[%s1 + $0xf0] sm:$0xff]
  %v90 = vld [vmem:[%s1 + $0xf8] sm:$0xff]
  %v91 = vld [vmem:[%s1 + $0x100] sm:$0xff]
  %v92 = vld [vmem:[%s1 + $0x108] sm:$0xff]
  %v93 = vld [vmem:[%s1 + $0x110] sm:$0xff]
  %v94 = vld [vmem:[%s1 + $0x118] sm:$0xff]
  %v95 = vld [vmem:[%s1 + $0x120] sm:$0xff]
  %v96 = vld [vmem:[%s1 + $0x128] sm:$0xff]
  %v97 = vld [vmem:[%s1 + $0x130] sm:$0xff]
  %v98 = vld [vmem:[%s1 + $0x138] sm:$0xff]
  %v99 = vld [vmem:[%s1 + $0x140] sm:$0xff]
  %v100 = vld [vmem:[%s1 + $0x148] sm:$0xff]
  %v101 = vld [vmem:[%s1 + $0x150] sm:$0xff]
  %v102 = vld [vmem:[%s1 + $0x158] sm:$0xff]
  %v103 = vld [vmem:[%s1 + $0x160] sm:$0xff]
  %v104 = vld [vmem:[%s1 + $0x168] sm:$0xff]
  %v105 = vld [vmem:[%s1 + $0x170] sm:$0xff]
  %v106 = vld [vmem:[%s1 + $0x178] sm:$0xff]
  %v107 = vld [vmem:[%s1 + $0x180] sm:$0xff]
  %v108 = vld [vmem:[%s1 + $0x188] sm:$0xff]
  %v109 = vld [vmem:[%s1 + $0x190] sm:$0xff]
  %v110 = vld [vmem:[%s1 + $0x198] sm:$0xff]
  %v111 = vld [vmem:[%s1 + $0x1a0] sm:$0xff]
  %v112 = vld [vmem:[%s1 + $0x1a8] sm:$0xff]
  %v113 = vld [vmem:[%s1 + $0x1b0] sm:$0xff]
  %v114 = vld [vmem:[%s1 + $0x1b8] sm:$0xff]
  %v115 = vld [vmem:[%s1 + $0x1c0] sm:$0xff]
  %v116 = vld [vmem:[%s1 + $0x1c8] sm:$0xff]
  %v117 = vld [vmem:[%s1 + $0x1d0] sm:$0xff]
  %v118 = vld [vmem:[%s1 + $0x1d8] sm:$0xff]
  %v119 = vld [vmem:[%s1 + $0x1e0] sm:$0xff]
  %v120 = vld [vmem:[%s1 + $0x1e8] sm:$0xff]
  %v121 = vld [vmem:[%s1 + $0x1f0] sm:$0xff]
  %v122 = vld [vmem:[%s1 + $0x1f8] sm:$0xff]
  %v123 = vld [vmem:[%s1 + $0x200] sm:$0xff]
  %v124 = vld [vmem:[%s1 + $0x208] sm:$0xff]
  %v125 = vld [vmem:[%s1 + $0x210] sm:$0xff]
  %v126 = vld [vmem:[%s1 + $0x218] sm:$0xff]
  %v127 = vld [vmem:[%s1 + $0x220] sm:$0xff]
  %v128 = vld [vmem:[%s1 + $0x228] sm:$0xff]
  %v129 = vld [vmem:[%s1 + $0x230] sm:$0xff]
  %v130 = vld [vmem:[%s1 + $0x238] sm:$0xff]
  %v131 = vld [vmem:[%s1 + $0x240] sm:$0xff]
  %v132 = vld [vmem:[%s1 + $0x248] sm:$0xff]
  %v133 = vld [vmem:[%s1 + $0x250] sm:$0xff]
  %v134 = vld [vmem:[%s1 + $0x258] sm:$0xff]
  %v135 = vld [vmem:[%s1 + $0x260] sm:$0xff]
  %v136 = vld [vmem:[%s1 + $0x268] sm:$0xff]
  %v137 = vld [vmem:[%s1 + $0x270] sm:$0xff]
  %v138 = vld [vmem:[%s1 + $0x278] sm:$0xff]
  %v139 = vld [vmem:[%s1 + $0x280] sm:$0xff]
  %v140 = vld [vmem:[%s1 + $0x288] sm:$0xff]
  %v141 = vld [vmem:[%s1 + $0x290] sm:$0xff]
  %v142 = vld [vmem:[%s1 + $0x298] sm:$0xff]
  %144 = vset.pattern.permute.xlu0 0
  %145 = vperm.xlu0 %144, %v17
  %v146 = vpop.permute.xlu0 %145
  %149 = vset.pattern.permute.xlu0 0
  %150 = vperm.xlu0 %149, %v18
  %v151 = vpop.permute.xlu0 %150
  %154 = vset.pattern.permute.xlu0 0
  %155 = vperm.xlu0 %154, %v19
  %v156 = vpop.permute.xlu0 %155
  %159 = vset.pattern.permute.xlu0 0
  %160 = vperm.xlu0 %159, %v20
  %v161 = vpop.permute.xlu0 %160
  %164 = vset.pattern.permute.xlu0 0
  %165 = vperm.xlu0 %164, %v21
  %v166 = vpop.permute.xlu0 %165
  %169 = vset.pattern.permute.xlu0 0
  %170 = vperm.xlu0 %169, %v22
  %v171 = vpop.permute.xlu0 %170
  %174 = vset.pattern.permute.xlu0 0
  %175 = vperm.xlu0 %174, %v23
  %v176 = vpop.permute.xlu0 %175
  %179 = vset.pattern.permute.xlu0 0
  %180 = vperm.xlu0 %179, %v24
  %v181 = vpop.permute.xlu0 %180
  %184 = vset.pattern.permute.xlu0 0
  %185 = vperm.xlu0 %184, %v25
  %v186 = vpop.permute.xlu0 %185
  %189 = vset.pattern.permute.xlu0 0
  %190 = vperm.xlu0 %189, %v26
  %v191 = vpop.permute.xlu0 %190
  %194 = vset.pattern.permute.xlu0 0
  %195 = vperm.xlu0 %194, %v27
  %v196 = vpop.permute.xlu0 %195
  %199 = vset.pattern.permute.xlu0 0
  %200 = vperm.xlu0 %199, %v28
  %v201 = vpop.permute.xlu0 %200
  %204 = vset.pattern.permute.xlu0 0
  %205 = vperm.xlu0 %204, %v29
  %v206 = vpop.permute.xlu0 %205
  %209 = vset.pattern.permute.xlu0 0
  %210 = vperm.xlu0 %209, %v30
  %v211 = vpop.permute.xlu0 %210
  %214 = vset.pattern.permute.xlu0 0
  %215 = vperm.xlu0 %214, %v31
  %v216 = vpop.permute.xlu0 %215
  %219 = vset.pattern.permute.xlu0 0
  %220 = vperm.xlu0 %219, %v32
  %v221 = vpop.permute.xlu0 %220
  %224 = vset.pattern.permute.xlu0 0
  %225 = vperm.xlu0 %224, %v33
  %v226 = vpop.permute.xlu0 %225
  %229 = vset.pattern.permute.xlu0 0
  %230 = vperm.xlu0 %229, %v34
  %v231 = vpop.permute.xlu0 %230
  %234 = vset.pattern.permute.xlu0 0
  %235 = vperm.xlu0 %234, %v35
  %v236 = vpop.permute.xlu0 %235
  %239 = vset.pattern.permute.xlu0 0
  %240 = vperm.xlu0 %239, %v36
  %v241 = vpop.permute.xlu0 %240
  %244 = vset.pattern.permute.xlu0 0
  %245 = vperm.xlu0 %244, %v37
  %v246 = vpop.permute.xlu0 %245
  %249 = vset.pattern.permute.xlu0 0
  %250 = vperm.xlu0 %249, %v38
  %v251 = vpop.permute.xlu0 %250
  %254 = vset.pattern.permute.xlu0 0
  %255 = vperm.xlu0 %254, %v39
  %v256 = vpop.permute.xlu0 %255
  %259 = vset.pattern.permute.xlu0 0
  %260 = vperm.xlu0 %259, %v40
  %v261 = vpop.permute.xlu0 %260
  %264 = vset.pattern.permute.xlu0 0
  %265 = vperm.xlu0 %264, %v41
  %v266 = vpop.permute.xlu0 %265
  %269 = vset.pattern.permute.xlu0 0
  %270 = vperm.xlu0 %269, %v42
  %v271 = vpop.permute.xlu0 %270
  %274 = vset.pattern.permute.xlu0 0
  %275 = vperm.xlu0 %274, %v43
  %v276 = vpop.permute.xlu0 %275
  %279 = vset.pattern.permute.xlu0 0
  %280 = vperm.xlu0 %279, %v44
  %v281 = vpop.permute.xlu0 %280
  %284 = vset.pattern.permute.xlu0 0
  %285 = vperm.xlu0 %284, %v45
  %v286 = vpop.permute.xlu0 %285
  %289 = vset.pattern.permute.xlu0 0
  %290 = vperm.xlu0 %289, %v46
  %v291 = vpop.permute.xlu0 %290
  %294 = vset.pattern.permute.xlu0 0
  %295 = vperm.xlu0 %294, %v47
  %v296 = vpop.permute.xlu0 %295
  %299 = vset.pattern.permute.xlu0 0
  %300 = vperm.xlu0 %299, %v48
  %v301 = vpop.permute.xlu0 %300
  %304 = vset.pattern.permute.xlu0 0
  %305 = vperm.xlu0 %304, %v49
  %v306 = vpop.permute.xlu0 %305
  %309 = vset.pattern.permute.xlu0 0
  %310 = vperm.xlu0 %309, %v50
  %v311 = vpop.permute.xlu0 %310
  %314 = vset.pattern.permute.xlu0 0
  %315 = vperm.xlu0 %314, %v51
  %v316 = vpop.permute.xlu0 %315
  %319 = vset.pattern.permute.xlu0 0
  %320 = vperm.xlu0 %319, %v52
  %v321 = vpop.permute.xlu0 %320
  %324 = vset.pattern.permute.xlu0 0
  %325 = vperm.xlu0 %324, %v53
  %v326 = vpop.permute.xlu0 %325
  %329 = vset.pattern.permute.xlu0 0
  %330 = vperm.xlu0 %329, %v54
  %v331 = vpop.permute.xlu0 %330
  %334 = vset.pattern.permute.xlu0 0
  %335 = vperm.xlu0 %334, %v55
  %v336 = vpop.permute.xlu0 %335
  %339 = vset.pattern.permute.xlu0 0
  %340 = vperm.xlu0 %339, %v56
  %v341 = vpop.permute.xlu0 %340
  %344 = vset.pattern.permute.xlu0 0
  %345 = vperm.xlu0 %344, %v57
  %v346 = vpop.permute.xlu0 %345
  %349 = vset.pattern.permute.xlu0 0
  %350 = vperm.xlu0 %349, %v58
  %v351 = vpop.permute.xlu0 %350
  %v353 = vmul.f32 %v146, %v59
  %v354 = vmul.f32 %v146, %v60
  %v355 = vmul.f32 %v151, %v61
  %v356 = vmul.f32 %v151, %v62
  %v357 = vmul.f32 %v156, %v63
  %v358 = vmul.f32 %v156, %v64
  %v359 = vmul.f32 %v161, %v65
  %v360 = vmul.f32 %v161, %v66
  %v361 = vmul.f32 %v166, %v67
  %v362 = vmul.f32 %v166, %v68
  %v363 = vmul.f32 %v171, %v69
  %v364 = vmul.f32 %v171, %v70
  %v365 = vmul.f32 %v176, %v71
  %v366 = vmul.f32 %v176, %v72
  %v367 = vmul.f32 %v181, %v73
  %v368 = vmul.f32 %v181, %v74
  %v369 = vmul.f32 %v186, %v75
  %v370 = vmul.f32 %v186, %v76
  %v371 = vmul.f32 %v191, %v77
  %v372 = vmul.f32 %v191, %v78
  %v373 = vmul.f32 %v196, %v79
  %v374 = vmul.f32 %v196, %v80
  %v375 = vmul.f32 %v201, %v81
  %v376 = vmul.f32 %v201, %v82
  %v377 = vmul.f32 %v206, %v83
  %v378 = vmul.f32 %v206, %v84
  %v379 = vmul.f32 %v211, %v85
  %v380 = vmul.f32 %v211, %v86
  %v381 = vmul.f32 %v216, %v87
  %v382 = vmul.f32 %v216, %v88
  %v383 = vmul.f32 %v221, %v89
  %v384 = vmul.f32 %v221, %v90
  %v385 = vmul.f32 %v226, %v91
  %v386 = vmul.f32 %v226, %v92
  %v387 = vmul.f32 %v231, %v93
  %v388 = vmul.f32 %v231, %v94
  %v389 = vmul.f32 %v236, %v95
  %v390 = vmul.f32 %v236, %v96
  %v391 = vmul.f32 %v241, %v97
  %v392 = vmul.f32 %v241, %v98
  %v393 = vmul.f32 %v246, %v99
  %v394 = vmul.f32 %v246, %v100
  %v395 = vmul.f32 %v251, %v101
  %v396 = vmul.f32 %v251, %v102
  %v397 = vmul.f32 %v256, %v103
  %v398 = vmul.f32 %v256, %v104
  %v399 = vmul.f32 %v261, %v105
  %v400 = vmul.f32 %v261, %v106
  %v401 = vmul.f32 %v266, %v107
  %v402 = vmul.f32 %v266, %v108
  %v403 = vmul.f32 %v271, %v109
  %v404 = vmul.f32 %v271, %v110
  %v405 = vmul.f32 %v276, %v111
  %v406 = vmul.f32 %v276, %v112
  %v407 = vmul.f32 %v281, %v113
  %v408 = vmul.f32 %v281, %v114
  %v409 = vmul.f32 %v286, %v115
  %v410 = vmul.f32 %v286, %v116
  %v411 = vmul.f32 %v291, %v117
  %v412 = vmul.f32 %v291, %v118
  %v413 = vmul.f32 %v296, %v119
  %v414 = vmul.f32 %v296, %v120
  %v415 = vmul.f32 %v301, %v121
  %v416 = vmul.f32 %v301, %v122
  %v417 = vmul.f32 %v306, %v123
  %v418 = vmul.f32 %v306, %v124
  %v419 = vmul.f32 %v311, %v125
  %v420 = vmul.f32 %v311, %v126
  %v421 = vmul.f32 %v316, %v127
  %v422 = vmul.f32 %v316, %v128
  %v423 = vmul.f32 %v321, %v129
  %v424 = vmul.f32 %v321, %v130
  %v425 = vmul.f32 %v326, %v131
  %v426 = vmul.f32 %v326, %v132
  %v427 = vmul.f32 %v331, %v133
  %v428 = vmul.f32 %v331, %v134
  %v429 = vmul.f32 %v336, %v135
  %v430 = vmul.f32 %v336, %v136
  %v431 = vmul.f32 %v341, %v137
  %v432 = vmul.f32 %v341, %v138
  %v433 = vmul.f32 %v346, %v139
  %v434 = vmul.f32 %v346, %v140
  %v435 = vmul.f32 %v351, %v141
  %v436 = vmul.f32 %v351, %v142
  %v437 = vld [vmem:[%s2] sm:$0xff]
  %v438 = vld [vmem:[%s2 + $0x8] sm:$0xff]
  %v439 = vld [vmem:[%s2 + $0x10] sm:$0xff]
  %v440 = vld [vmem:[%s2 + $0x18] sm:$0xff]
  %v441 = vld [vmem:[%s2 + $0x20] sm:$0xff]
  %v442 = vld [vmem:[%s2 + $0x28] sm:$0xff]
  %v443 = vld [vmem:[%s2 + $0x30] sm:$0xff]
  %v444 = vld [vmem:[%s2 + $0x38] sm:$0xff]
  %v445 = vld [vmem:[%s2 + $0x40] sm:$0xff]
  %v446 = vld [vmem:[%s2 + $0x48] sm:$0xff]
  %v447 = vld [vmem:[%s2 + $0x50] sm:$0xff]
  %v448 = vld [vmem:[%s2 + $0x58] sm:$0xff]
  %v449 = vld [vmem:[%s2 + $0x60] sm:$0xff]
  %v450 = vld [vmem:[%s2 + $0x68] sm:$0xff]
  %v451 = vld [vmem:[%s2 + $0x70] sm:$0xff]
  %v452 = vld [vmem:[%s2 + $0x78] sm:$0xff]
  %v453 = vld [vmem:[%s2 + $0x80] sm:$0xff]
  %v454 = vld [vmem:[%s2 + $0x88] sm:$0xff]
  %v455 = vld [vmem:[%s2 + $0x90] sm:$0xff]
  %v456 = vld [vmem:[%s2 + $0x98] sm:$0xff]
  %v457 = vld [vmem:[%s2 + $0xa0] sm:$0xff]
  %v458 = vld [vmem:[%s2 + $0xa8] sm:$0xff]
  %v459 = vld [vmem:[%s2 + $0xb0] sm:$0xff]
  %v460 = vld [vmem:[%s2 + $0xb8] sm:$0xff]
  %v461 = vld [vmem:[%s2 + $0xc0] sm:$0xff]
  %v462 = vld [vmem:[%s2 + $0xc8] sm:$0xff]
  %v463 = vld [vmem:[%s2 + $0xd0] sm:$0xff]
  %v464 = vld [vmem:[%s2 + $0xd8] sm:$0xff]
  %v465 = vld [vmem:[%s2 + $0xe0] sm:$0xff]
  %v466 = vld [vmem:[%s2 + $0xe8] sm:$0xff]
  %v467 = vld [vmem:[%s2 + $0xf0] sm:$0xff]
  %v468 = vld [vmem:[%s2 + $0xf8] sm:$0xff]
  %v469 = vld [vmem:[%s2 + $0x100] sm:$0xff]
  %v470 = vld [vmem:[%s2 + $0x108] sm:$0xff]
  %v471 = vld [vmem:[%s2 + $0x110] sm:$0xff]
  %v472 = vld [vmem:[%s2 + $0x118] sm:$0xff]
  %v473 = vld [vmem:[%s2 + $0x120] sm:$0xff]
  %v474 = vld [vmem:[%s2 + $0x128] sm:$0xff]
  %v475 = vld [vmem:[%s2 + $0x130] sm:$0xff]
  %v476 = vld [vmem:[%s2 + $0x138] sm:$0xff]
  %v477 = vld [vmem:[%s2 + $0x140] sm:$0xff]
  %v478 = vld [vmem:[%s2 + $0x148] sm:$0xff]
  %v479 = vld [vmem:[%s2 + $0x150] sm:$0xff]
  %v480 = vld [vmem:[%s2 + $0x158] sm:$0xff]
  %v481 = vld [vmem:[%s2 + $0x160] sm:$0xff]
  %v482 = vld [vmem:[%s2 + $0x168] sm:$0xff]
  %v483 = vld [vmem:[%s2 + $0x170] sm:$0xff]
  %v484 = vld [vmem:[%s2 + $0x178] sm:$0xff]
  %v485 = vld [vmem:[%s2 + $0x180] sm:$0xff]
  %v486 = vld [vmem:[%s2 + $0x188] sm:$0xff]
  %v487 = vld [vmem:[%s2 + $0x190] sm:$0xff]
  %v488 = vld [vmem:[%s2 + $0x198] sm:$0xff]
  %v489 = vld [vmem:[%s2 + $0x1a0] sm:$0xff]
  %v490 = vld [vmem:[%s2 + $0x1a8] sm:$0xff]
  %v491 = vld [vmem:[%s2 + $0x1b0] sm:$0xff]
  %v492 = vld [vmem:[%s2 + $0x1b8] sm:$0xff]
  %v493 = vld [vmem:[%s2 + $0x1c0] sm:$0xff]
  %v494 = vld [vmem:[%s2 + $0x1c8] sm:$0xff]
  %v495 = vld [vmem:[%s2 + $0x1d0] sm:$0xff]
  %v496 = vld [vmem:[%s2 + $0x1d8] sm:$0xff]
  %v497 = vld [vmem:[%s2 + $0x1e0] sm:$0xff]
  %v498 = vld [vmem:[%s2 + $0x1e8] sm:$0xff]
  %v499 = vld [vmem:[%s2 + $0x1f0] sm:$0xff]
  %v500 = vld [vmem:[%s2 + $0x1f8] sm:$0xff]
  %v501 = vld [vmem:[%s2 + $0x200] sm:$0xff]
  %v502 = vld [vmem:[%s2 + $0x208] sm:$0xff]
  %v503 = vld [vmem:[%s2 + $0x210] sm:$0xff]
  %v504 = vld [vmem:[%s2 + $0x218] sm:$0xff]
  %v505 = vld [vmem:[%s2 + $0x220] sm:$0xff]
  %v506 = vld [vmem:[%s2 + $0x228] sm:$0xff]
  %v507 = vld [vmem:[%s2 + $0x230] sm:$0xff]
  %v508 = vld [vmem:[%s2 + $0x238] sm:$0xff]
  %v509 = vld [vmem:[%s2 + $0x240] sm:$0xff]
  %v510 = vld [vmem:[%s2 + $0x248] sm:$0xff]
  %v511 = vld [vmem:[%s2 + $0x250] sm:$0xff]
  %v512 = vld [vmem:[%s2 + $0x258] sm:$0xff]
  %v513 = vld [vmem:[%s2 + $0x260] sm:$0xff]
  %v514 = vld [vmem:[%s2 + $0x268] sm:$0xff]
  %v515 = vld [vmem:[%s2 + $0x270] sm:$0xff]
  %v516 = vld [vmem:[%s2 + $0x278] sm:$0xff]
  %v517 = vld [vmem:[%s2 + $0x280] sm:$0xff]
  %v518 = vld [vmem:[%s2 + $0x288] sm:$0xff]
  %v519 = vld [vmem:[%s2 + $0x290] sm:$0xff]
  %v520 = vld [vmem:[%s2 + $0x298] sm:$0xff]
  %v521 = vld [vmem:[%s2 + $0x2a0] sm:$0xff]
  %v522 = vld [vmem:[%s2 + $0x2a8] sm:$0xff]
  %v523 = vld [vmem:[%s2 + $0x2b0] sm:$0xff]
  %v524 = vld [vmem:[%s2 + $0x2b8] sm:$0xff]
  %v525 = vld [vmem:[%s2 + $0x2c0] sm:$0xff]
  %v526 = vld [vmem:[%s2 + $0x2c8] sm:$0xff]
  %v527 = vld [vmem:[%s2 + $0x2d0] sm:$0xff]
  %v528 = vld [vmem:[%s2 + $0x2d8] sm:$0xff]
  %v529 = vld [vmem:[%s2 + $0x2e0] sm:$0xff]
  %v530 = vld [vmem:[%s2 + $0x2e8] sm:$0xff]
  %v531 = vld [vmem:[%s2 + $0x2f0] sm:$0xff]
  %v532 = vld [vmem:[%s2 + $0x2f8] sm:$0xff]
  %v533 = vld [vmem:[%s2 + $0x300] sm:$0xff]
  %v534 = vld [vmem:[%s2 + $0x308] sm:$0xff]
  %v535 = vld [vmem:[%s2 + $0x310] sm:$0xff]
  %v536 = vld [vmem:[%s2 + $0x318] sm:$0xff]
  %v537 = vld [vmem:[%s2 + $0x320] sm:$0xff]
  %v538 = vld [vmem:[%s2 + $0x328] sm:$0xff]
  %v539 = vld [vmem:[%s2 + $0x330] sm:$0xff]
  %v540 = vld [vmem:[%s2 + $0x338] sm:$0xff]
  %v541 = vld [vmem:[%s2 + $0x340] sm:$0xff]
  %v542 = vld [vmem:[%s2 + $0x348] sm:$0xff]
  %v543 = vld [vmem:[%s2 + $0x350] sm:$0xff]
  %v544 = vld [vmem:[%s2 + $0x358] sm:$0xff]
  %v545 = vld [vmem:[%s2 + $0x360] sm:$0xff]
  %v546 = vld [vmem:[%s2 + $0x368] sm:$0xff]
  %v547 = vld [vmem:[%s2 + $0x370] sm:$0xff]
  %v548 = vld [vmem:[%s2 + $0x378] sm:$0xff]
  %v549 = vld [vmem:[%s2 + $0x380] sm:$0xff]
  %v550 = vld [vmem:[%s2 + $0x388] sm:$0xff]
  %v551 = vld [vmem:[%s2 + $0x390] sm:$0xff]
  %v552 = vld [vmem:[%s2 + $0x398] sm:$0xff]
  %v553 = vld [vmem:[%s2 + $0x3a0] sm:$0xff]
  %v554 = vld [vmem:[%s2 + $0x3a8] sm:$0xff]
  %v555 = vld [vmem:[%s2 + $0x3b0] sm:$0xff]
  %v556 = vld [vmem:[%s2 + $0x3b8] sm:$0xff]
  %v557 = vld [vmem:[%s2 + $0x3c0] sm:$0xff]
  %v558 = vld [vmem:[%s2 + $0x3c8] sm:$0xff]
  %v559 = vld [vmem:[%s2 + $0x3d0] sm:$0xff]
  %v560 = vld [vmem:[%s2 + $0x3d8] sm:$0xff]
  %v561 = vld [vmem:[%s2 + $0x3e0] sm:$0xff]
  %v562 = vld [vmem:[%s2 + $0x3e8] sm:$0xff]
  %vm563 = vcmask 654336
  %v565 = vsel %vm563, %v439, 0
  %v568 = vsel %vm563, %v442, 0
  %v571 = vsel %vm563, %v445, 0
  %v574 = vsel %vm563, %v448, 0
  %v577 = vsel %vm563, %v451, 0
  %v580 = vsel %vm563, %v454, 0
  %v583 = vsel %vm563, %v457, 0
  %v586 = vsel %vm563, %v460, 0
  %v589 = vsel %vm563, %v463, 0
  %v592 = vsel %vm563, %v466, 0
  %v595 = vsel %vm563, %v469, 0
  %v598 = vsel %vm563, %v472, 0
  %v601 = vsel %vm563, %v475, 0
  %v604 = vsel %vm563, %v478, 0
  %v607 = vsel %vm563, %v481, 0
  %v610 = vsel %vm563, %v484, 0
  %v613 = vsel %vm563, %v487, 0
  %v616 = vsel %vm563, %v490, 0
  %v619 = vsel %vm563, %v493, 0
  %v622 = vsel %vm563, %v496, 0
  %v625 = vsel %vm563, %v499, 0
  %v628 = vsel %vm563, %v502, 0
  %v631 = vsel %vm563, %v505, 0
  %v634 = vsel %vm563, %v508, 0
  %v637 = vsel %vm563, %v511, 0
  %v640 = vsel %vm563, %v514, 0
  %v643 = vsel %vm563, %v517, 0
  %v646 = vsel %vm563, %v520, 0
  %v649 = vsel %vm563, %v523, 0
  %v652 = vsel %vm563, %v526, 0
  %v655 = vsel %vm563, %v529, 0
  %v658 = vsel %vm563, %v532, 0
  %v661 = vsel %vm563, %v535, 0
  %v664 = vsel %vm563, %v538, 0
  %v667 = vsel %vm563, %v541, 0
  %v670 = vsel %vm563, %v544, 0
  %v673 = vsel %vm563, %v547, 0
  %v676 = vsel %vm563, %v550, 0
  %v679 = vsel %vm563, %v553, 0
  %v682 = vsel %vm563, %v556, 0
  %v685 = vsel %vm563, %v559, 0
  %v688 = vsel %vm563, %v562, 0
  %690 = vmatprep.subr.mxu0 %v354
  %691 = vmatpush1.msra.mxu0 %v353
  %692 = vmatprep.subr.mxu0 %v356
  %693 = vmatpush1.msra.mxu0 %v355
  %694 = vmatprep.subr.mxu0 %v358
  %695 = vmatpush1.msra.mxu0 %v357
  %696 = vmatprep.subr.mxu0 %v360
  %697 = vmatpush1.msra.mxu0 %v359
  %698 = vmatprep.subr.mxu0 %v362
  %699 = vmatpush1.msra.mxu0 %v361
  %700 = vmatprep.subr.mxu0 %v364
  %701 = vmatpush1.msra.mxu0 %v363
  %702 = vmatprep.subr.mxu0 %v366
  %703 = vmatpush1.msra.mxu0 %v365
  %704 = vmatprep.subr.mxu0 %v368
  %705 = vmatpush1.msra.mxu0 %v367
  %706 = vmatprep.subr.mxu0 %v370
  %707 = vmatpush1.msra.mxu0 %v369
  %708 = vmatprep.subr.mxu0 %v372
  %709 = vmatpush1.msra.mxu0 %v371
  %710 = vmatprep.subr.mxu0 %v374
  %711 = vmatpush1.msra.mxu0 %v373
  %712 = vmatprep.subr.mxu0 %v376
  %713 = vmatpush1.msra.mxu0 %v375
  %714 = vmatprep.subr.mxu0 %v378
  %715 = vmatpush1.msra.mxu0 %v377
  %716 = vmatprep.subr.mxu0 %v380
  %717 = vmatpush1.msra.mxu0 %v379
  %718 = vmatprep.subr.mxu0 %v382
  %719 = vmatpush1.msra.mxu0 %v381
  %720 = vmatprep.subr.mxu0 %v384
  %721 = vmatpush1.msra.mxu0 %v383
  %722 = vmatprep.subr.mxu0 %v386
  %723 = vmatpush1.msra.mxu0 %v385
  %724 = vmatprep.subr.mxu0 %v388
  %725 = vmatpush1.msra.mxu0 %v387
  %726 = vmatprep.subr.mxu0 %v390
  %727 = vmatpush1.msra.mxu0 %v389
  %728 = vmatprep.subr.mxu0 %v392
  %729 = vmatpush1.msra.mxu0 %v391
  %730 = vmatprep.subr.mxu0 %v394
  %731 = vmatpush1.msra.mxu0 %v393
  %732 = vmatprep.subr.mxu0 %v396
  %733 = vmatpush1.msra.mxu0 %v395
  %734 = vmatprep.subr.mxu0 %v398
  %735 = vmatpush1.msra.mxu0 %v397
  %736 = vmatprep.subr.mxu0 %v400
  %737 = vmatpush1.msra.mxu0 %v399
  %738 = vmatprep.subr.mxu0 %v402
  %739 = vmatpush1.msra.mxu0 %v401
  %740 = vmatprep.subr.mxu0 %v404
  %741 = vmatpush1.msra.mxu0 %v403
  %742 = vmatprep.subr.mxu0 %v406
  %743 = vmatpush1.msra.mxu0 %v405
  %744 = vmatprep.subr.mxu0 %v408
  %745 = vmatpush1.msra.mxu0 %v407
  %746 = vmatprep.subr.mxu0 %v410
  %747 = vmatpush1.msra.mxu0 %v409
  %748 = vmatprep.subr.mxu0 %v412
  %749 = vmatpush1.msra.mxu0 %v411
  %750 = vmatprep.subr.mxu0 %v414
  %751 = vmatpush1.msra.mxu0 %v413
  %752 = vmatprep.subr.mxu0 %v416
  %753 = vmatpush1.msra.mxu0 %v415
  %754 = vmatprep.mubr.f32.mxu0 %v438
  %755 = vmatmul.mubr.f32.gmra.mrb[0].mxu0 %v437
  %v756 = vpop.f32.mrb[0].mxu0
  %v757 = vadd.f32 0.0, %v756
  %v758 = vpop.f32.mrb[0].mxu0
  %v759 = vadd.f32 0.0, %v758
  %760 = vmatprep.mubr.f32.mxu0 %v441
  %761 = vmatmul.mubr.f32.gmra.mrb[0].mxu0 %v440
  %v762 = vpop.f32.mrb[0].mxu0
  %v763 = vadd.f32 0.0, %v762
  %v764 = vpop.f32.mrb[0].mxu0
  %v765 = vadd.f32 0.0, %v764
  %766 = vmatprep.mubr.f32.mxu0 %v444
  %767 = vmatmul.mubr.f32.gmra.mrb[0].mxu0 %v443
  %v768 = vpop.f32.mrb[0].mxu0
  %v769 = vadd.f32 0.0, %v768
  %v770 = vpop.f32.mrb[0].mxu0
  %v771 = vadd.f32 0.0, %v770
  %772 = vmatprep.mubr.f32.mxu0 %v447
  %773 = vmatmul.mubr.f32.gmra.mrb[0].mxu0 %v446
  %v774 = vpop.f32.mrb[0].mxu0
  %v775 = vadd.f32 0.0, %v774
  %v776 = vpop.f32.mrb[0].mxu0
  %v777 = vadd.f32 0.0, %v776
  %778 = vmatprep.mubr.f32.mxu0 %v450
  %779 = vmatmul.mubr.f32.gmra.mrb[0].mxu0 %v449
  %v780 = vpop.f32.mrb[0].mxu0
  %v781 = vadd.f32 0.0, %v780
  %v782 = vpop.f32.mrb[0].mxu0
  %v783 = vadd.f32 0.0, %v782
  %784 = vmatprep.mubr.f32.mxu0 %v453
  %785 = vmatmul.mubr.f32.gmra.mrb[0].mxu0 %v452
  %v786 = vpop.f32.mrb[0].mxu0
  %v787 = vadd.f32 0.0, %v786
  %v788 = vpop.f32.mrb[0].mxu0
  %v789 = vadd.f32 0.0, %v788
  %790 = vmatprep.mubr.f32.mxu0 %v456
  %791 = vmatmul.mubr.f32.gmra.mrb[0].mxu0 %v455
  %v792 = vpop.f32.mrb[0].mxu0
  %v793 = vadd.f32 0.0, %v792
  %v794 = vpop.f32.mrb[0].mxu0
  %v795 = vadd.f32 0.0, %v794
  %796 = vmatprep.mubr.f32.mxu0 %v459
  %797 = vmatmul.mubr.f32.gmra.mrb[0].mxu0 %v458
  %v798 = vpop.f32.mrb[0].mxu0
  %v799 = vadd.f32 0.0, %v798
  %v800 = vpop.f32.mrb[0].mxu0
  %v801 = vadd.f32 0.0, %v800
  %802 = vmatprep.mubr.f32.mxu0 %v462
  %803 = vmatmul.mubr.f32.gmra.mrb[0].mxu0 %v461
  %v804 = vpop.f32.mrb[0].mxu0
  %v805 = vadd.f32 0.0, %v804
  %v806 = vpop.f32.mrb[0].mxu0
  %v807 = vadd.f32 0.0, %v806
  %808 = vmatprep.mubr.f32.mxu0 %v465
  %809 = vmatmul.mubr.f32.gmra.mrb[0].mxu0 %v464
  %v810 = vpop.f32.mrb[0].mxu0
  %v811 = vadd.f32 0.0, %v810
  %v812 = vpop.f32.mrb[0].mxu0
  %v813 = vadd.f32 0.0, %v812
  %814 = vmatprep.mubr.f32.mxu0 %v468
  %815 = vmatmul.mubr.f32.gmra.mrb[0].mxu0 %v467
  %v816 = vpop.f32.mrb[0].mxu0
  %v817 = vadd.f32 0.0, %v816
  %v818 = vpop.f32.mrb[0].mxu0
  %v819 = vadd.f32 0.0, %v818
  %820 = vmatprep.mubr.f32.mxu0 %v471
  %821 = vmatmul.mubr.f32.gmra.mrb[0].mxu0 %v470
  %v822 = vpop.f32.mrb[0].mxu0
  %v823 = vadd.f32 0.0, %v822
  %v824 = vpop.f32.mrb[0].mxu0
  %v825 = vadd.f32 0.0, %v824
  %826 = vmatprep.mubr.f32.mxu0 %v474
  %827 = vmatmul.mubr.f32.gmra.mrb[0].mxu0 %v473
  %v828 = vpop.f32.mrb[0].mxu0
  %v829 = vadd.f32 0.0, %v828
  %v830 = vpop.f32.mrb[0].mxu0
  %v831 = vadd.f32 0.0, %v830
  %832 = vmatprep.mubr.f32.mxu0 %v477
  %833 = vmatmul.mubr.f32.gmra.mrb[0].mxu0 %v476
  %v834 = vpop.f32.mrb[0].mxu0
  %v835 = vadd.f32 0.0, %v834
  %v836 = vpop.f32.mrb[0].mxu0
  %v837 = vadd.f32 0.0, %v836
  %838 = vmatprep.mubr.f32.mxu0 %v480
  %839 = vmatmul.mubr.f32.gmra.mrb[0].mxu0 %v479
  %v840 = vpop.f32.mrb[0].mxu0
  %v841 = vadd.f32 0.0, %v840
  %v842 = vpop.f32.mrb[0].mxu0
  %v843 = vadd.f32 0.0, %v842
  %844 = vmatprep.mubr.f32.mxu0 %v483
  %845 = vmatmul.mubr.f32.gmra.mrb[0].mxu0 %v482
  %v846 = vpop.f32.mrb[0].mxu0
  %v847 = vadd.f32 0.0, %v846
  %v848 = vpop.f32.mrb[0].mxu0
  %v849 = vadd.f32 0.0, %v848
  %850 = vmatprep.mubr.f32.mxu0 %v486
  %851 = vmatmul.mubr.f32.gmra.mrb[0].mxu0 %v485
  %v852 = vpop.f32.mrb[0].mxu0
  %v853 = vadd.f32 0.0, %v852
  %v854 = vpop.f32.mrb[0].mxu0
  %v855 = vadd.f32 0.0, %v854
  %856 = vmatprep.mubr.f32.mxu0 %v489
  %857 = vmatmul.mubr.f32.gmra.mrb[0].mxu0 %v488
  %v858 = vpop.f32.mrb[0].mxu0
  %v859 = vadd.f32 0.0, %v858
  %v860 = vpop.f32.mrb[0].mxu0
  %v861 = vadd.f32 0.0, %v860
  %862 = vmatprep.mubr.f32.mxu0 %v492
  %863 = vmatmul.mubr.f32.gmra.mrb[0].mxu0 %v491
  %v864 = vpop.f32.mrb[0].mxu0
  %v865 = vadd.f32 0.0, %v864
  %v866 = vpop.f32.mrb[0].mxu0
  %v867 = vadd.f32 0.0, %v866
  %868 = vmatprep.mubr.f32.mxu0 %v495
  %869 = vmatmul.mubr.f32.gmra.mrb[0].mxu0 %v494
  %v870 = vpop.f32.mrb[0].mxu0
  %v871 = vadd.f32 0.0, %v870
  %v872 = vpop.f32.mrb[0].mxu0
  %v873 = vadd.f32 0.0, %v872
  %874 = vmatprep.mubr.f32.mxu0 %v498
  %875 = vmatmul.mubr.f32.gmra.mrb[0].mxu0 %v497
  %v876 = vpop.f32.mrb[0].mxu0
  %v877 = vadd.f32 0.0, %v876
  %v878 = vpop.f32.mrb[0].mxu0
  %v879 = vadd.f32 0.0, %v878
  %880 = vmatprep.mubr.f32.mxu0 %v501
  %881 = vmatmul.mubr.f32.gmra.mrb[0].mxu0 %v500
  %v882 = vpop.f32.mrb[0].mxu0
  %v883 = vadd.f32 0.0, %v882
  %v884 = vpop.f32.mrb[0].mxu0
  %v885 = vadd.f32 0.0, %v884
  %886 = vmatprep.mubr.f32.mxu0 %v504
  %887 = vmatmul.mubr.f32.gmra.mrb[0].mxu0 %v503
  %v888 = vpop.f32.mrb[0].mxu0
  %v889 = vadd.f32 0.0, %v888
  %v890 = vpop.f32.mrb[0].mxu0
  %v891 = vadd.f32 0.0, %v890
  %892 = vmatprep.mubr.f32.mxu0 %v507
  %893 = vmatmul.mubr.f32.gmra.mrb[0].mxu0 %v506
  %v894 = vpop.f32.mrb[0].mxu0
  %v895 = vadd.f32 0.0, %v894
  %v896 = vpop.f32.mrb[0].mxu0
  %v897 = vadd.f32 0.0, %v896
  %898 = vmatprep.mubr.f32.mxu0 %v510
  %899 = vmatmul.mubr.f32.gmra.mrb[0].mxu0 %v509
  %v900 = vpop.f32.mrb[0].mxu0
  %v901 = vadd.f32 0.0, %v900
  %v902 = vpop.f32.mrb[0].mxu0
  %v903 = vadd.f32 0.0, %v902
  %904 = vmatprep.mubr.f32.mxu0 %v513
  %905 = vmatmul.mubr.f32.gmra.mrb[0].mxu0 %v512
  %v906 = vpop.f32.mrb[0].mxu0
  %v907 = vadd.f32 0.0, %v906
  %v908 = vpop.f32.mrb[0].mxu0
  %v909 = vadd.f32 0.0, %v908
  %910 = vmatprep.mubr.f32.mxu0 %v516
  %911 = vmatmul.mubr.f32.gmra.mrb[0].mxu0 %v515
  %v912 = vpop.f32.mrb[0].mxu0
  %v913 = vadd.f32 0.0, %v912
  %v914 = vpop.f32.mrb[0].mxu0
  %v915 = vadd.f32 0.0, %v914
  %916 = vmatprep.mubr.f32.mxu0 %v519
  %917 = vmatmul.mubr.f32.gmra.mrb[0].mxu0 %v518
  %v918 = vpop.f32.mrb[0].mxu0
  %v919 = vadd.f32 0.0, %v918
  %v920 = vpop.f32.mrb[0].mxu0
  %v921 = vadd.f32 0.0, %v920
  %922 = vmatprep.mubr.f32.mxu0 %v522
  %923 = vmatmul.mubr.f32.gmra.mrb[0].mxu0 %v521
  %v924 = vpop.f32.mrb[0].mxu0
  %v925 = vadd.f32 0.0, %v924
  %v926 = vpop.f32.mrb[0].mxu0
  %v927 = vadd.f32 0.0, %v926
  %928 = vmatprep.mubr.f32.mxu0 %v525
  %929 = vmatmul.mubr.f32.gmra.mrb[0].mxu0 %v524
  %v930 = vpop.f32.mrb[0].mxu0
  %v931 = vadd.f32 0.0, %v930
  %v932 = vpop.f32.mrb[0].mxu0
  %v933 = vadd.f32 0.0, %v932
  %934 = vmatprep.mubr.f32.mxu0 %v528
  %935 = vmatmul.mubr.f32.gmra.mrb[0].mxu0 %v527
  %v936 = vpop.f32.mrb[0].mxu0
  %v937 = vadd.f32 0.0, %v936
  %v938 = vpop.f32.mrb[0].mxu0
  %v939 = vadd.f32 0.0, %v938
  %940 = vmatprep.mubr.f32.mxu0 %v531
  %941 = vmatmul.mubr.f32.gmra.mrb[0].mxu0 %v530
  %v942 = vpop.f32.mrb[0].mxu0
  %v943 = vadd.f32 0.0, %v942
  %v944 = vpop.f32.mrb[0].mxu0
  %v945 = vadd.f32 0.0, %v944
  %946 = vmatprep.mubr.f32.mxu0 %v534
  %947 = vmatmul.mubr.f32.gmra.mrb[0].mxu0 %v533
  %v948 = vpop.f32.mrb[0].mxu0
  %v949 = vadd.f32 0.0, %v948
  %v950 = vpop.f32.mrb[0].mxu0
  %v951 = vadd.f32 0.0, %v950
  %952 = vmatprep.mubr.f32.mxu0 %v537
  %953 = vmatmul.mubr.f32.gmra.mrb[0].mxu0 %v536
  %v954 = vpop.f32.mrb[0].mxu0
  %v955 = vadd.f32 0.0, %v954
  %v956 = vpop.f32.mrb[0].mxu0
  %v957 = vadd.f32 0.0, %v956
  %958 = vmatprep.mubr.f32.mxu0 %v540
  %959 = vmatmul.mubr.f32.gmra.mrb[0].mxu0 %v539
  %v960 = vpop.f32.mrb[0].mxu0
  %v961 = vadd.f32 0.0, %v960
  %v962 = vpop.f32.mrb[0].mxu0
  %v963 = vadd.f32 0.0, %v962
  %964 = vmatprep.mubr.f32.mxu0 %v543
  %965 = vmatmul.mubr.f32.gmra.mrb[0].mxu0 %v542
  %v966 = vpop.f32.mrb[0].mxu0
  %v967 = vadd.f32 0.0, %v966
  %v968 = vpop.f32.mrb[0].mxu0
  %v969 = vadd.f32 0.0, %v968
  %970 = vmatprep.mubr.f32.mxu0 %v546
  %971 = vmatmul.mubr.f32.gmra.mrb[0].mxu0 %v545
  %v972 = vpop.f32.mrb[0].mxu0
  %v973 = vadd.f32 0.0, %v972
  %v974 = vpop.f32.mrb[0].mxu0
  %v975 = vadd.f32 0.0, %v974
  %976 = vmatprep.mubr.f32.mxu0 %v549
  %977 = vmatmul.mubr.f32.gmra.mrb[0].mxu0 %v548
  %v978 = vpop.f32.mrb[0].mxu0
  %v979 = vadd.f32 0.0, %v978
  %v980 = vpop.f32.mrb[0].mxu0
  %v981 = vadd.f32 0.0, %v980
  %982 = vmatprep.mubr.f32.mxu0 %v552
  %983 = vmatmul.mubr.f32.gmra.mrb[0].mxu0 %v551
  %v984 = vpop.f32.mrb[0].mxu0
  %v985 = vadd.f32 0.0, %v984
  %v986 = vpop.f32.mrb[0].mxu0
  %v987 = vadd.f32 0.0, %v986
  %988 = vmatprep.mubr.f32.mxu0 %v555
  %989 = vmatmul.mubr.f32.gmra.mrb[0].mxu0 %v554
  %v990 = vpop.f32.mrb[0].mxu0
  %v991 = vadd.f32 0.0, %v990
  %v992 = vpop.f32.mrb[0].mxu0
  %v993 = vadd.f32 0.0, %v992
  %994 = vmatprep.mubr.f32.mxu0 %v558
  %995 = vmatmul.mubr.f32.gmra.mrb[0].mxu0 %v557
  %v996 = vpop.f32.mrb[0].mxu0
  %v997 = vadd.f32 0.0, %v996
  %v998 = vpop.f32.mrb[0].mxu0
  %v999 = vadd.f32 0.0, %v998
  %1000 = vmatprep.mubr.f32.mxu0 %v561
  %1001 = vmatmul.mubr.f32.gmra.mrb[0].mxu0 %v560
  %v1002 = vpop.f32.mrb[0].mxu0
  %v1003 = vadd.f32 0.0, %v1002
  %v1004 = vpop.f32.mrb[0].mxu0
  %v1005 = vadd.f32 0.0, %v1004
  %1006 = vdwg.mxu0
  %1007 = vmatprep.subr.mxu0 %v418
  %1008 = vmatpush1.msra.mxu0 %v417
  %1009 = vmatprep.subr.mxu0 %v420
  %1010 = vmatpush1.msra.mxu0 %v419
  %1011 = vmatprep.subr.mxu0 %v422
  %1012 = vmatpush1.msra.mxu0 %v421
  %1013 = vmatprep.subr.mxu0 %v424
  %1014 = vmatpush1.msra.mxu0 %v423
  %1015 = vmatprep.subr.mxu0 %v426
  %1016 = vmatpush1.msra.mxu0 %v425
  %1017 = vmatprep.subr.mxu0 %v428
  %1018 = vmatpush1.msra.mxu0 %v427
  %1019 = vmatprep.subr.mxu0 %v430
  %1020 = vmatpush1.msra.mxu0 %v429
  %1021 = vmatprep.subr.mxu0 %v432
  %1022 = vmatpush1.msra.mxu0 %v431
  %1023 = vmatprep.subr.mxu0 %v434
  %1024 = vmatpush1.msra.mxu0 %v433
  %1025 = vmatprep.subr.mxu0 %v436
  %1026 = vmatpush1.msra.mxu0 %v435
  %1027 = vmatprep.subr.mxu0 0.0
  %1028 = vmatpush1.msra.mxu0 0.0
  %1029 = vmatprep.subr.mxu0 0.0
  %1030 = vmatpush1.msra.mxu0 0.0
  %1031 = vmatprep.subr.mxu0 0.0
  %1032 = vmatpush1.msra.mxu0 0.0
  %1033 = vmatprep.subr.mxu0 0.0
  %1034 = vmatpush1.msra.mxu0 0.0
  %1035 = vmatprep.subr.mxu0 0.0
  %1036 = vmatpush1.msra.mxu0 0.0
  %1037 = vmatprep.subr.mxu0 0.0
  %1038 = vmatpush1.msra.mxu0 0.0
  %1039 = vmatprep.subr.mxu0 0.0
  %1040 = vmatpush1.msra.mxu0 0.0
  %1041 = vmatprep.subr.mxu0 0.0
  %1042 = vmatpush1.msra.mxu0 0.0
  %1043 = vmatprep.subr.mxu0 0.0
  %1044 = vmatpush1.msra.mxu0 0.0
  %1045 = vmatprep.subr.mxu0 0.0
  %1046 = vmatpush1.msra.mxu0 0.0
  %1047 = vmatprep.subr.mxu0 0.0
  %1048 = vmatpush1.msra.mxu0 0.0
  %1049 = vmatprep.subr.mxu0 0.0
  %1050 = vmatpush1.msra.mxu0 0.0
  %1051 = vmatprep.subr.mxu0 0.0
  %1052 = vmatpush1.msra.mxu0 0.0
  %1053 = vmatprep.subr.mxu0 0.0
  %1054 = vmatpush1.msra.mxu0 0.0
  %1055 = vmatprep.subr.mxu0 0.0
  %1056 = vmatpush1.msra.mxu0 0.0
  %1057 = vmatprep.subr.mxu0 0.0
  %1058 = vmatpush1.msra.mxu0 0.0
  %1059 = vmatprep.subr.mxu0 0.0
  %1060 = vmatpush1.msra.mxu0 0.0
  %1061 = vmatprep.subr.mxu0 0.0
  %1062 = vmatpush1.msra.mxu0 0.0
  %1063 = vmatprep.subr.mxu0 0.0
  %1064 = vmatpush1.msra.mxu0 0.0
  %1065 = vmatprep.subr.mxu0 0.0
  %1066 = vmatpush1.msra.mxu0 0.0
  %1067 = vmatprep.subr.mxu0 0.0
  %1068 = vmatpush1.msra.mxu0 0.0
  %1069 = vmatprep.subr.mxu0 0.0
  %1070 = vmatpush1.msra.mxu0 0.0
  %1071 = vmatprep.mubr.f32.mxu0 0.0
  %1072 = vmatmul.mubr.f32.gmra.mrb[0].mxu0 %v565
  %v1073 = vpop.f32.mrb[0].mxu0
  %v1074 = vadd.f32 %v757, %v1073
  %v1075 = vpop.f32.mrb[0].mxu0
  %v1076 = vadd.f32 %v759, %v1075
  %1077 = vmatprep.mubr.f32.mxu0 0.0
  %1078 = vmatmul.mubr.f32.gmra.mrb[0].mxu0 %v568
  %v1079 = vpop.f32.mrb[0].mxu0
  %v1080 = vadd.f32 %v763, %v1079
  %v1081 = vpop.f32.mrb[0].mxu0
  %v1082 = vadd.f32 %v765, %v1081
  %1083 = vmatprep.mubr.f32.mxu0 0.0
  %1084 = vmatmul.mubr.f32.gmra.mrb[0].mxu0 %v571
  %v1085 = vpop.f32.mrb[0].mxu0
  %v1086 = vadd.f32 %v769, %v1085
  %v1087 = vpop.f32.mrb[0].mxu0
  %v1088 = vadd.f32 %v771, %v1087
  %1089 = vmatprep.mubr.f32.mxu0 0.0
  %1090 = vmatmul.mubr.f32.gmra.mrb[0].mxu0 %v574
  %v1091 = vpop.f32.mrb[0].mxu0
  %v1092 = vadd.f32 %v775, %v1091
  %v1093 = vpop.f32.mrb[0].mxu0
  %v1094 = vadd.f32 %v777, %v1093
  %1095 = vmatprep.mubr.f32.mxu0 0.0
  %1096 = vmatmul.mubr.f32.gmra.mrb[0].mxu0 %v577
  %v1097 = vpop.f32.mrb[0].mxu0
  %v1098 = vadd.f32 %v781, %v1097
  %v1099 = vpop.f32.mrb[0].mxu0
  %v1100 = vadd.f32 %v783, %v1099
  %1101 = vmatprep.mubr.f32.mxu0 0.0
  %1102 = vmatmul.mubr.f32.gmra.mrb[0].mxu0 %v580
  %v1103 = vpop.f32.mrb[0].mxu0
  %v1104 = vadd.f32 %v787, %v1103
  %v1105 = vpop.f32.mrb[0].mxu0
  %v1106 = vadd.f32 %v789, %v1105
  %1107 = vmatprep.mubr.f32.mxu0 0.0
  %1108 = vmatmul.mubr.f32.gmra.mrb[0].mxu0 %v583
  %v1109 = vpop.f32.mrb[0].mxu0
  %v1110 = vadd.f32 %v793, %v1109
  %v1111 = vpop.f32.mrb[0].mxu0
  %v1112 = vadd.f32 %v795, %v1111
  %1113 = vmatprep.mubr.f32.mxu0 0.0
  %1114 = vmatmul.mubr.f32.gmra.mrb[0].mxu0 %v586
  %v1115 = vpop.f32.mrb[0].mxu0
  %v1116 = vadd.f32 %v799, %v1115
  %v1117 = vpop.f32.mrb[0].mxu0
  %v1118 = vadd.f32 %v801, %v1117
  %1119 = vmatprep.mubr.f32.mxu0 0.0
  %1120 = vmatmul.mubr.f32.gmra.mrb[0].mxu0 %v589
  %v1121 = vpop.f32.mrb[0].mxu0
  %v1122 = vadd.f32 %v805, %v1121
  %v1123 = vpop.f32.mrb[0].mxu0
  %v1124 = vadd.f32 %v807, %v1123
  %1125 = vmatprep.mubr.f32.mxu0 0.0
  %1126 = vmatmul.mubr.f32.gmra.mrb[0].mxu0 %v592
  %v1127 = vpop.f32.mrb[0].mxu0
  %v1128 = vadd.f32 %v811, %v1127
  %v1129 = vpop.f32.mrb[0].mxu0
  %v1130 = vadd.f32 %v813, %v1129
  %1131 = vmatprep.mubr.f32.mxu0 0.0
  %1132 = vmatmul.mubr.f32.gmra.mrb[0].mxu0 %v595
  %v1133 = vpop.f32.mrb[0].mxu0
  %v1134 = vadd.f32 %v817, %v1133
  %v1135 = vpop.f32.mrb[0].mxu0
  %v1136 = vadd.f32 %v819, %v1135
  %1137 = vmatprep.mubr.f32.mxu0 0.0
  %1138 = vmatmul.mubr.f32.gmra.mrb[0].mxu0 %v598
  %v1139 = vpop.f32.mrb[0].mxu0
  %v1140 = vadd.f32 %v823, %v1139
  %v1141 = vpop.f32.mrb[0].mxu0
  %v1142 = vadd.f32 %v825, %v1141
  %1143 = vmatprep.mubr.f32.mxu0 0.0
  %1144 = vmatmul.mubr.f32.gmra.mrb[0].mxu0 %v601
  %v1145 = vpop.f32.mrb[0].mxu0
  %v1146 = vadd.f32 %v829, %v1145
  %v1147 = vpop.f32.mrb[0].mxu0
  %v1148 = vadd.f32 %v831, %v1147
  %1149 = vmatprep.mubr.f32.mxu0 0.0
  %1150 = vmatmul.mubr.f32.gmra.mrb[0].mxu0 %v604
  %v1151 = vpop.f32.mrb[0].mxu0
  %v1152 = vadd.f32 %v835, %v1151
  %v1153 = vpop.f32.mrb[0].mxu0
  %v1154 = vadd.f32 %v837, %v1153
  %1155 = vmatprep.mubr.f32.mxu0 0.0
  %1156 = vmatmul.mubr.f32.gmra.mrb[0].mxu0 %v607
  %v1157 = vpop.f32.mrb[0].mxu0
  %v1158 = vadd.f32 %v841, %v1157
  %v1159 = vpop.f32.mrb[0].mxu0
  %v1160 = vadd.f32 %v843, %v1159
  %1161 = vmatprep.mubr.f32.mxu0 0.0
  %1162 = vmatmul.mubr.f32.gmra.mrb[0].mxu0 %v610
  %v1163 = vpop.f32.mrb[0].mxu0
  %v1164 = vadd.f32 %v847, %v1163
  %v1165 = vpop.f32.mrb[0].mxu0
  %v1166 = vadd.f32 %v849, %v1165
  %1167 = vmatprep.mubr.f32.mxu0 0.0
  %1168 = vmatmul.mubr.f32.gmra.mrb[0].mxu0 %v613
  %v1169 = vpop.f32.mrb[0].mxu0
  %v1170 = vadd.f32 %v853, %v1169
  %v1171 = vpop.f32.mrb[0].mxu0
  %v1172 = vadd.f32 %v855, %v1171
  %1173 = vmatprep.mubr.f32.mxu0 0.0
  %1174 = vmatmul.mubr.f32.gmra.mrb[0].mxu0 %v616
  %v1175 = vpop.f32.mrb[0].mxu0
  %v1176 = vadd.f32 %v859, %v1175
  %v1177 = vpop.f32.mrb[0].mxu0
  %v1178 = vadd.f32 %v861, %v1177
  %1179 = vmatprep.mubr.f32.mxu0 0.0
  %1180 = vmatmul.mubr.f32.gmra.mrb[0].mxu0 %v619
  %v1181 = vpop.f32.mrb[0].mxu0
  %v1182 = vadd.f32 %v865, %v1181
  %v1183 = vpop.f32.mrb[0].mxu0
  %v1184 = vadd.f32 %v867, %v1183
  %1185 = vmatprep.mubr.f32.mxu0 0.0
  %1186 = vmatmul.mubr.f32.gmra.mrb[0].mxu0 %v622
  %v1187 = vpop.f32.mrb[0].mxu0
  %v1188 = vadd.f32 %v871, %v1187
  %v1189 = vpop.f32.mrb[0].mxu0
  %v1190 = vadd.f32 %v873, %v1189
  %1191 = vmatprep.mubr.f32.mxu0 0.0
  %1192 = vmatmul.mubr.f32.gmra.mrb[0].mxu0 %v625
  %v1193 = vpop.f32.mrb[0].mxu0
  %v1194 = vadd.f32 %v877, %v1193
  %v1195 = vpop.f32.mrb[0].mxu0
  %v1196 = vadd.f32 %v879, %v1195
  %1197 = vmatprep.mubr.f32.mxu0 0.0
  %1198 = vmatmul.mubr.f32.gmra.mrb[0].mxu0 %v628
  %v1199 = vpop.f32.mrb[0].mxu0
  %v1200 = vadd.f32 %v883, %v1199
  %v1201 = vpop.f32.mrb[0].mxu0
  %v1202 = vadd.f32 %v885, %v1201
  %1203 = vmatprep.mubr.f32.mxu0 0.0
  %1204 = vmatmul.mubr.f32.gmra.mrb[0].mxu0 %v631
  %v1205 = vpop.f32.mrb[0].mxu0
  %v1206 = vadd.f32 %v889, %v1205
  %v1207 = vpop.f32.mrb[0].mxu0
  %v1208 = vadd.f32 %v891, %v1207
  %1209 = vmatprep.mubr.f32.mxu0 0.0
  %1210 = vmatmul.mubr.f32.gmra.mrb[0].mxu0 %v634
  %v1211 = vpop.f32.mrb[0].mxu0
  %v1212 = vadd.f32 %v895, %v1211
  %v1213 = vpop.f32.mrb[0].mxu0
  %v1214 = vadd.f32 %v897, %v1213
  %1215 = vmatprep.mubr.f32.mxu0 0.0
  %1216 = vmatmul.mubr.f32.gmra.mrb[0].mxu0 %v637
  %v1217 = vpop.f32.mrb[0].mxu0
  %v1218 = vadd.f32 %v901, %v1217
  %v1219 = vpop.f32.mrb[0].mxu0
  %v1220 = vadd.f32 %v903, %v1219
  %1221 = vmatprep.mubr.f32.mxu0 0.0
  %1222 = vmatmul.mubr.f32.gmra.mrb[0].mxu0 %v640
  %v1223 = vpop.f32.mrb[0].mxu0
  %v1224 = vadd.f32 %v907, %v1223
  %v1225 = vpop.f32.mrb[0].mxu0
  %v1226 = vadd.f32 %v909, %v1225
  %1227 = vmatprep.mubr.f32.mxu0 0.0
  %1228 = vmatmul.mubr.f32.gmra.mrb[0].mxu0 %v643
  %v1229 = vpop.f32.mrb[0].mxu0
  %v1230 = vadd.f32 %v913, %v1229
  %v1231 = vpop.f32.mrb[0].mxu0
  %v1232 = vadd.f32 %v915, %v1231
  %1233 = vmatprep.mubr.f32.mxu0 0.0
  %1234 = vmatmul.mubr.f32.gmra.mrb[0].mxu0 %v646
  %v1235 = vpop.f32.mrb[0].mxu0
  %v1236 = vadd.f32 %v919, %v1235
  %v1237 = vpop.f32.mrb[0].mxu0
  %v1238 = vadd.f32 %v921, %v1237
  %1239 = vmatprep.mubr.f32.mxu0 0.0
  %1240 = vmatmul.mubr.f32.gmra.mrb[0].mxu0 %v649
  %v1241 = vpop.f32.mrb[0].mxu0
  %v1242 = vadd.f32 %v925, %v1241
  %v1243 = vpop.f32.mrb[0].mxu0
  %v1244 = vadd.f32 %v927, %v1243
  %1245 = vmatprep.mubr.f32.mxu0 0.0
  %1246 = vmatmul.mubr.f32.gmra.mrb[0].mxu0 %v652
  %v1247 = vpop.f32.mrb[0].mxu0
  %v1248 = vadd.f32 %v931, %v1247
  %v1249 = vpop.f32.mrb[0].mxu0
  %v1250 = vadd.f32 %v933, %v1249
  %1251 = vmatprep.mubr.f32.mxu0 0.0
  %1252 = vmatmul.mubr.f32.gmra.mrb[0].mxu0 %v655
  %v1253 = vpop.f32.mrb[0].mxu0
  %v1254 = vadd.f32 %v937, %v1253
  %v1255 = vpop.f32.mrb[0].mxu0
  %v1256 = vadd.f32 %v939, %v1255
  %1257 = vmatprep.mubr.f32.mxu0 0.0
  %1258 = vmatmul.mubr.f32.gmra.mrb[0].mxu0 %v658
  %v1259 = vpop.f32.mrb[0].mxu0
  %v1260 = vadd.f32 %v943, %v1259
  %v1261 = vpop.f32.mrb[0].mxu0
  %v1262 = vadd.f32 %v945, %v1261
  %1263 = vmatprep.mubr.f32.mxu0 0.0
  %1264 = vmatmul.mubr.f32.gmra.mrb[0].mxu0 %v661
  %v1265 = vpop.f32.mrb[0].mxu0
  %v1266 = vadd.f32 %v949, %v1265
  %v1267 = vpop.f32.mrb[0].mxu0
  %v1268 = vadd.f32 %v951, %v1267
  %1269 = vmatprep.mubr.f32.mxu0 0.0
  %1270 = vmatmul.mubr.f32.gmra.mrb[0].mxu0 %v664
  %v1271 = vpop.f32.mrb[0].mxu0
  %v1272 = vadd.f32 %v955, %v1271
  %v1273 = vpop.f32.mrb[0].mxu0
  %v1274 = vadd.f32 %v957, %v1273
  %1275 = vmatprep.mubr.f32.mxu0 0.0
  %1276 = vmatmul.mubr.f32.gmra.mrb[0].mxu0 %v667
  %v1277 = vpop.f32.mrb[0].mxu0
  %v1278 = vadd.f32 %v961, %v1277
  %v1279 = vpop.f32.mrb[0].mxu0
  %v1280 = vadd.f32 %v963, %v1279
  %1281 = vmatprep.mubr.f32.mxu0 0.0
  %1282 = vmatmul.mubr.f32.gmra.mrb[0].mxu0 %v670
  %v1283 = vpop.f32.mrb[0].mxu0
  %v1284 = vadd.f32 %v967, %v1283
  %v1285 = vpop.f32.mrb[0].mxu0
  %v1286 = vadd.f32 %v969, %v1285
  %1287 = vmatprep.mubr.f32.mxu0 0.0
  %1288 = vmatmul.mubr.f32.gmra.mrb[0].mxu0 %v673
  %v1289 = vpop.f32.mrb[0].mxu0
  %v1290 = vadd.f32 %v973, %v1289
  %v1291 = vpop.f32.mrb[0].mxu0
  %v1292 = vadd.f32 %v975, %v1291
  %1293 = vmatprep.mubr.f32.mxu0 0.0
  %1294 = vmatmul.mubr.f32.gmra.mrb[0].mxu0 %v676
  %v1295 = vpop.f32.mrb[0].mxu0
  %v1296 = vadd.f32 %v979, %v1295
  %v1297 = vpop.f32.mrb[0].mxu0
  %v1298 = vadd.f32 %v981, %v1297
  %1299 = vmatprep.mubr.f32.mxu0 0.0
  %1300 = vmatmul.mubr.f32.gmra.mrb[0].mxu0 %v679
  %v1301 = vpop.f32.mrb[0].mxu0
  %v1302 = vadd.f32 %v985, %v1301
  %v1303 = vpop.f32.mrb[0].mxu0
  %v1304 = vadd.f32 %v987, %v1303
  %1305 = vmatprep.mubr.f32.mxu0 0.0
  %1306 = vmatmul.mubr.f32.gmra.mrb[0].mxu0 %v682
  %v1307 = vpop.f32.mrb[0].mxu0
  %v1308 = vadd.f32 %v991, %v1307
  %v1309 = vpop.f32.mrb[0].mxu0
  %v1310 = vadd.f32 %v993, %v1309
  %1311 = vmatprep.mubr.f32.mxu0 0.0
  %1312 = vmatmul.mubr.f32.gmra.mrb[0].mxu0 %v685
  %v1313 = vpop.f32.mrb[0].mxu0
  %v1314 = vadd.f32 %v997, %v1313
  %v1315 = vpop.f32.mrb[0].mxu0
  %v1316 = vadd.f32 %v999, %v1315
  %1317 = vmatprep.mubr.f32.mxu0 0.0
  %1318 = vmatmul.mubr.f32.gmra.mrb[0].mxu0 %v688
  %v1319 = vpop.f32.mrb[0].mxu0
  %v1320 = vadd.f32 %v1003, %v1319
  %v1321 = vpop.f32.mrb[0].mxu0
  %v1322 = vadd.f32 %v1005, %v1321
  %1323 = vdwg.mxu0
  %vm1324 = vcmask 556032
  %v1325 = vsel %vm1324, %v1076, 0.0
  %v1326 = vadd.f32 %v1074, %v1325
  %1327 = vadd.xlane.f32.xlu0 %v1326
  %v1328 = vpop.xlane.xlu0 %1327
  %v1329 = vsel %vm1324, %v1082, 0.0
  %v1330 = vadd.f32 %v1080, %v1329
  %1331 = vadd.xlane.f32.xlu0 %v1330
  %v1332 = vpop.xlane.xlu0 %1331
  %v1333 = vsel %vm1324, %v1088, 0.0
  %v1334 = vadd.f32 %v1086, %v1333
  %1335 = vadd.xlane.f32.xlu0 %v1334
  %v1336 = vpop.xlane.xlu0 %1335
  %v1337 = vsel %vm1324, %v1094, 0.0
  %v1338 = vadd.f32 %v1092, %v1337
  %1339 = vadd.xlane.f32.xlu0 %v1338
  %v1340 = vpop.xlane.xlu0 %1339
  %v1341 = vsel %vm1324, %v1100, 0.0
  %v1342 = vadd.f32 %v1098, %v1341
  %1343 = vadd.xlane.f32.xlu0 %v1342
  %v1344 = vpop.xlane.xlu0 %1343
  %v1345 = vsel %vm1324, %v1106, 0.0
  %v1346 = vadd.f32 %v1104, %v1345
  %1347 = vadd.xlane.f32.xlu0 %v1346
  %v1348 = vpop.xlane.xlu0 %1347
  %v1349 = vsel %vm1324, %v1112, 0.0
  %v1350 = vadd.f32 %v1110, %v1349
  %1351 = vadd.xlane.f32.xlu0 %v1350
  %v1352 = vpop.xlane.xlu0 %1351
  %v1353 = vsel %vm1324, %v1118, 0.0
  %v1354 = vadd.f32 %v1116, %v1353
  %1355 = vadd.xlane.f32.xlu0 %v1354
  %v1356 = vpop.xlane.xlu0 %1355
  %v1357 = vsel %vm1324, %v1124, 0.0
  %v1358 = vadd.f32 %v1122, %v1357
  %1359 = vadd.xlane.f32.xlu0 %v1358
  %v1360 = vpop.xlane.xlu0 %1359
  %v1361 = vsel %vm1324, %v1130, 0.0
  %v1362 = vadd.f32 %v1128, %v1361
  %1363 = vadd.xlane.f32.xlu0 %v1362
  %v1364 = vpop.xlane.xlu0 %1363
  %v1365 = vsel %vm1324, %v1136, 0.0
  %v1366 = vadd.f32 %v1134, %v1365
  %1367 = vadd.xlane.f32.xlu0 %v1366
  %v1368 = vpop.xlane.xlu0 %1367
  %v1369 = vsel %vm1324, %v1142, 0.0
  %v1370 = vadd.f32 %v1140, %v1369
  %1371 = vadd.xlane.f32.xlu0 %v1370
  %v1372 = vpop.xlane.xlu0 %1371
  %v1373 = vsel %vm1324, %v1148, 0.0
  %v1374 = vadd.f32 %v1146, %v1373
  %1375 = vadd.xlane.f32.xlu0 %v1374
  %v1376 = vpop.xlane.xlu0 %1375
  %v1377 = vsel %vm1324, %v1154, 0.0
  %v1378 = vadd.f32 %v1152, %v1377
  %1379 = vadd.xlane.f32.xlu0 %v1378
  %v1380 = vpop.xlane.xlu0 %1379
  %v1381 = vsel %vm1324, %v1160, 0.0
  %v1382 = vadd.f32 %v1158, %v1381
  %1383 = vadd.xlane.f32.xlu0 %v1382
  %v1384 = vpop.xlane.xlu0 %1383
  %v1385 = vsel %vm1324, %v1166, 0.0
  %v1386 = vadd.f32 %v1164, %v1385
  %1387 = vadd.xlane.f32.xlu0 %v1386
  %v1388 = vpop.xlane.xlu0 %1387
  %v1389 = vsel %vm1324, %v1172, 0.0
  %v1390 = vadd.f32 %v1170, %v1389
  %1391 = vadd.xlane.f32.xlu0 %v1390
  %v1392 = vpop.xlane.xlu0 %1391
  %v1393 = vsel %vm1324, %v1178, 0.0
  %v1394 = vadd.f32 %v1176, %v1393
  %1395 = vadd.xlane.f32.xlu0 %v1394
  %v1396 = vpop.xlane.xlu0 %1395
  %v1397 = vsel %vm1324, %v1184, 0.0
  %v1398 = vadd.f32 %v1182, %v1397
  %1399 = vadd.xlane.f32.xlu0 %v1398
  %v1400 = vpop.xlane.xlu0 %1399
  %v1401 = vsel %vm1324, %v1190, 0.0
  %v1402 = vadd.f32 %v1188, %v1401
  %1403 = vadd.xlane.f32.xlu0 %v1402
  %v1404 = vpop.xlane.xlu0 %1403
  %v1405 = vsel %vm1324, %v1196, 0.0
  %v1406 = vadd.f32 %v1194, %v1405
  %1407 = vadd.xlane.f32.xlu0 %v1406
  %v1408 = vpop.xlane.xlu0 %1407
  %v1409 = vsel %vm1324, %v1202, 0.0
  %v1410 = vadd.f32 %v1200, %v1409
  %1411 = vadd.xlane.f32.xlu0 %v1410
  %v1412 = vpop.xlane.xlu0 %1411
  %v1413 = vsel %vm1324, %v1208, 0.0
  %v1414 = vadd.f32 %v1206, %v1413
  %1415 = vadd.xlane.f32.xlu0 %v1414
  %v1416 = vpop.xlane.xlu0 %1415
  %v1417 = vsel %vm1324, %v1214, 0.0
  %v1418 = vadd.f32 %v1212, %v1417
  %1419 = vadd.xlane.f32.xlu0 %v1418
  %v1420 = vpop.xlane.xlu0 %1419
  %v1421 = vsel %vm1324, %v1220, 0.0
  %v1422 = vadd.f32 %v1218, %v1421
  %1423 = vadd.xlane.f32.xlu0 %v1422
  %v1424 = vpop.xlane.xlu0 %1423
  %v1425 = vsel %vm1324, %v1226, 0.0
  %v1426 = vadd.f32 %v1224, %v1425
  %1427 = vadd.xlane.f32.xlu0 %v1426
  %v1428 = vpop.xlane.xlu0 %1427
  %v1429 = vsel %vm1324, %v1232, 0.0
  %v1430 = vadd.f32 %v1230, %v1429
  %1431 = vadd.xlane.f32.xlu0 %v1430
  %v1432 = vpop.xlane.xlu0 %1431
  %v1433 = vsel %vm1324, %v1238, 0.0
  %v1434 = vadd.f32 %v1236, %v1433
  %1435 = vadd.xlane.f32.xlu0 %v1434
  %v1436 = vpop.xlane.xlu0 %1435
  %v1437 = vsel %vm1324, %v1244, 0.0
  %v1438 = vadd.f32 %v1242, %v1437
  %1439 = vadd.xlane.f32.xlu0 %v1438
  %v1440 = vpop.xlane.xlu0 %1439
  %v1441 = vsel %vm1324, %v1250, 0.0
  %v1442 = vadd.f32 %v1248, %v1441
  %1443 = vadd.xlane.f32.xlu0 %v1442
  %v1444 = vpop.xlane.xlu0 %1443
  %v1445 = vsel %vm1324, %v1256, 0.0
  %v1446 = vadd.f32 %v1254, %v1445
  %1447 = vadd.xlane.f32.xlu0 %v1446
  %v1448 = vpop.xlane.xlu0 %1447
  %v1449 = vsel %vm1324, %v1262, 0.0
  %v1450 = vadd.f32 %v1260, %v1449
  %1451 = vadd.xlane.f32.xlu0 %v1450
  %v1452 = vpop.xlane.xlu0 %1451
  %v1453 = vsel %vm1324, %v1268, 0.0
  %v1454 = vadd.f32 %v1266, %v1453
  %1455 = vadd.xlane.f32.xlu0 %v1454
  %v1456 = vpop.xlane.xlu0 %1455
  %v1457 = vsel %vm1324, %v1274, 0.0
  %v1458 = vadd.f32 %v1272, %v1457
  %1459 = vadd.xlane.f32.xlu0 %v1458
  %v1460 = vpop.xlane.xlu0 %1459
  %v1461 = vsel %vm1324, %v1280, 0.0
  %v1462 = vadd.f32 %v1278, %v1461
  %1463 = vadd.xlane.f32.xlu0 %v1462
  %v1464 = vpop.xlane.xlu0 %1463
  %v1465 = vsel %vm1324, %v1286, 0.0
  %v1466 = vadd.f32 %v1284, %v1465
  %1467 = vadd.xlane.f32.xlu0 %v1466
  %v1468 = vpop.xlane.xlu0 %1467
  %v1469 = vsel %vm1324, %v1292, 0.0
  %v1470 = vadd.f32 %v1290, %v1469
  %1471 = vadd.xlane.f32.xlu0 %v1470
  %v1472 = vpop.xlane.xlu0 %1471
  %v1473 = vsel %vm1324, %v1298, 0.0
  %v1474 = vadd.f32 %v1296, %v1473
  %1475 = vadd.xlane.f32.xlu0 %v1474
  %v1476 = vpop.xlane.xlu0 %1475
  %v1477 = vsel %vm1324, %v1304, 0.0
  %v1478 = vadd.f32 %v1302, %v1477
  %1479 = vadd.xlane.f32.xlu0 %v1478
  %v1480 = vpop.xlane.xlu0 %1479
  %v1481 = vsel %vm1324, %v1310, 0.0
  %v1482 = vadd.f32 %v1308, %v1481
  %1483 = vadd.xlane.f32.xlu0 %v1482
  %v1484 = vpop.xlane.xlu0 %1483
  %v1485 = vsel %vm1324, %v1316, 0.0
  %v1486 = vadd.f32 %v1314, %v1485
  %1487 = vadd.xlane.f32.xlu0 %v1486
  %v1488 = vpop.xlane.xlu0 %1487
  %v1489 = vsel %vm1324, %v1322, 0.0
  %v1490 = vadd.f32 %v1320, %v1489
  %1491 = vadd.xlane.f32.xlu0 %v1490
  %v1492 = vpop.xlane.xlu0 %1491
  %v1493 = vmul.f32 %v1328, 0.0051020407
  %v1494 = vmul.f32 %v1332, 0.0051020407
  %v1495 = vmul.f32 %v1336, 0.0051020407
  %v1496 = vmul.f32 %v1340, 0.0051020407
  %v1497 = vmul.f32 %v1344, 0.0051020407
  %v1498 = vmul.f32 %v1348, 0.0051020407
  %v1499 = vmul.f32 %v1352, 0.0051020407
  %v1500 = vmul.f32 %v1356, 0.0051020407
  %v1501 = vmul.f32 %v1360, 0.0051020407
  %v1502 = vmul.f32 %v1364, 0.0051020407
  %v1503 = vmul.f32 %v1368, 0.0051020407
  %v1504 = vmul.f32 %v1372, 0.0051020407
  %v1505 = vmul.f32 %v1376, 0.0051020407
  %v1506 = vmul.f32 %v1380, 0.0051020407
  %v1507 = vmul.f32 %v1384, 0.0051020407
  %v1508 = vmul.f32 %v1388, 0.0051020407
  %v1509 = vmul.f32 %v1392, 0.0051020407
  %v1510 = vmul.f32 %v1396, 0.0051020407
  %v1511 = vmul.f32 %v1400, 0.0051020407
  %v1512 = vmul.f32 %v1404, 0.0051020407
  %v1513 = vmul.f32 %v1408, 0.0051020407
  %v1514 = vmul.f32 %v1412, 0.0051020407
  %v1515 = vmul.f32 %v1416, 0.0051020407
  %v1516 = vmul.f32 %v1420, 0.0051020407
  %v1517 = vmul.f32 %v1424, 0.0051020407
  %v1518 = vmul.f32 %v1428, 0.0051020407
  %v1519 = vmul.f32 %v1432, 0.0051020407
  %v1520 = vmul.f32 %v1436, 0.0051020407
  %v1521 = vmul.f32 %v1440, 0.0051020407
  %v1522 = vmul.f32 %v1444, 0.0051020407
  %v1523 = vmul.f32 %v1448, 0.0051020407
  %v1524 = vmul.f32 %v1452, 0.0051020407
  %v1525 = vmul.f32 %v1456, 0.0051020407
  %v1526 = vmul.f32 %v1460, 0.0051020407
  %v1527 = vmul.f32 %v1464, 0.0051020407
  %v1528 = vmul.f32 %v1468, 0.0051020407
  %v1529 = vmul.f32 %v1472, 0.0051020407
  %v1530 = vmul.f32 %v1476, 0.0051020407
  %v1531 = vmul.f32 %v1480, 0.0051020407
  %v1532 = vmul.f32 %v1484, 0.0051020407
  %v1533 = vmul.f32 %v1488, 0.0051020407
  %v1534 = vmul.f32 %v1492, 0.0051020407
  %v1535 = vsub.f32 %v1074, %v1493
  %v1536 = vsub.f32 %v1076, %v1493
  %v1537 = vsub.f32 %v1080, %v1494
  %v1538 = vsub.f32 %v1082, %v1494
  %v1539 = vsub.f32 %v1086, %v1495
  %v1540 = vsub.f32 %v1088, %v1495
  %v1541 = vsub.f32 %v1092, %v1496
  %v1542 = vsub.f32 %v1094, %v1496
  %v1543 = vsub.f32 %v1098, %v1497
  %v1544 = vsub.f32 %v1100, %v1497
  %v1545 = vsub.f32 %v1104, %v1498
  %v1546 = vsub.f32 %v1106, %v1498
  %v1547 = vsub.f32 %v1110, %v1499
  %v1548 = vsub.f32 %v1112, %v1499
  %v1549 = vsub.f32 %v1116, %v1500
  %v1550 = vsub.f32 %v1118, %v1500
  %v1551 = vsub.f32 %v1122, %v1501
  %v1552 = vsub.f32 %v1124, %v1501
  %v1553 = vsub.f32 %v1128, %v1502
  %v1554 = vsub.f32 %v1130, %v1502
  %v1555 = vsub.f32 %v1134, %v1503
  %v1556 = vsub.f32 %v1136, %v1503
  %v1557 = vsub.f32 %v1140, %v1504
  %v1558 = vsub.f32 %v1142, %v1504
  %v1559 = vsub.f32 %v1146, %v1505
  %v1560 = vsub.f32 %v1148, %v1505
  %v1561 = vsub.f32 %v1152, %v1506
  %v1562 = vsub.f32 %v1154, %v1506
  %v1563 = vsub.f32 %v1158, %v1507
  %v1564 = vsub.f32 %v1160, %v1507
  %v1565 = vsub.f32 %v1164, %v1508
  %v1566 = vsub.f32 %v1166, %v1508
  %v1567 = vsub.f32 %v1170, %v1509
  %v1568 = vsub.f32 %v1172, %v1509
  %v1569 = vsub.f32 %v1176, %v1510
  %v1570 = vsub.f32 %v1178, %v1510
  %v1571 = vsub.f32 %v1182, %v1511
  %v1572 = vsub.f32 %v1184, %v1511
  %v1573 = vsub.f32 %v1188, %v1512
  %v1574 = vsub.f32 %v1190, %v1512
  %v1575 = vsub.f32 %v1194, %v1513
  %v1576 = vsub.f32 %v1196, %v1513
  %v1577 = vsub.f32 %v1200, %v1514
  %v1578 = vsub.f32 %v1202, %v1514
  %v1579 = vsub.f32 %v1206, %v1515
  %v1580 = vsub.f32 %v1208, %v1515
  %v1581 = vsub.f32 %v1212, %v1516
  %v1582 = vsub.f32 %v1214, %v1516
  %v1583 = vsub.f32 %v1218, %v1517
  %v1584 = vsub.f32 %v1220, %v1517
  %v1585 = vsub.f32 %v1224, %v1518
  %v1586 = vsub.f32 %v1226, %v1518
  %v1587 = vsub.f32 %v1230, %v1519
  %v1588 = vsub.f32 %v1232, %v1519
  %v1589 = vsub.f32 %v1236, %v1520
  %v1590 = vsub.f32 %v1238, %v1520
  %v1591 = vsub.f32 %v1242, %v1521
  %v1592 = vsub.f32 %v1244, %v1521
  %v1593 = vsub.f32 %v1248, %v1522
  %v1594 = vsub.f32 %v1250, %v1522
  %v1595 = vsub.f32 %v1254, %v1523
  %v1596 = vsub.f32 %v1256, %v1523
  %v1597 = vsub.f32 %v1260, %v1524
  %v1598 = vsub.f32 %v1262, %v1524
  %v1599 = vsub.f32 %v1266, %v1525
  %v1600 = vsub.f32 %v1268, %v1525
  %v1601 = vsub.f32 %v1272, %v1526
  %v1602 = vsub.f32 %v1274, %v1526
  %v1603 = vsub.f32 %v1278, %v1527
  %v1604 = vsub.f32 %v1280, %v1527
  %v1605 = vsub.f32 %v1284, %v1528
  %v1606 = vsub.f32 %v1286, %v1528
  %v1607 = vsub.f32 %v1290, %v1529
  %v1608 = vsub.f32 %v1292, %v1529
  %v1609 = vsub.f32 %v1296, %v1530
  %v1610 = vsub.f32 %v1298, %v1530
  %v1611 = vsub.f32 %v1302, %v1531
  %v1612 = vsub.f32 %v1304, %v1531
  %v1613 = vsub.f32 %v1308, %v1532
  %v1614 = vsub.f32 %v1310, %v1532
  %v1615 = vsub.f32 %v1314, %v1533
  %v1616 = vsub.f32 %v1316, %v1533
  %v1617 = vsub.f32 %v1320, %v1534
  %v1618 = vsub.f32 %v1322, %v1534
  %v1619 = vmul.f32 %v1535, %v1535
  %v1620 = vmul.f32 %v1536, %v1536
  %v1621 = vmul.f32 %v1537, %v1537
  %v1622 = vmul.f32 %v1538, %v1538
  %v1623 = vmul.f32 %v1539, %v1539
  %v1624 = vmul.f32 %v1540, %v1540
  %v1625 = vmul.f32 %v1541, %v1541
  %v1626 = vmul.f32 %v1542, %v1542
  %v1627 = vmul.f32 %v1543, %v1543
  %v1628 = vmul.f32 %v1544, %v1544
  %v1629 = vmul.f32 %v1545, %v1545
  %v1630 = vmul.f32 %v1546, %v1546
  %v1631 = vmul.f32 %v1547, %v1547
  %v1632 = vmul.f32 %v1548, %v1548
  %v1633 = vmul.f32 %v1549, %v1549
  %v1634 = vmul.f32 %v1550, %v1550
  %v1635 = vmul.f32 %v1551, %v1551
  %v1636 = vmul.f32 %v1552, %v1552
  %v1637 = vmul.f32 %v1553, %v1553
  %v1638 = vmul.f32 %v1554, %v1554
  %v1639 = vmul.f32 %v1555, %v1555
  %v1640 = vmul.f32 %v1556, %v1556
  %v1641 = vmul.f32 %v1557, %v1557
  %v1642 = vmul.f32 %v1558, %v1558
  %v1643 = vmul.f32 %v1559, %v1559
  %v1644 = vmul.f32 %v1560, %v1560
  %v1645 = vmul.f32 %v1561, %v1561
  %v1646 = vmul.f32 %v1562, %v1562
  %v1647 = vmul.f32 %v1563, %v1563
  %v1648 = vmul.f32 %v1564, %v1564
  %v1649 = vmul.f32 %v1565, %v1565
  %v1650 = vmul.f32 %v1566, %v1566
  %v1651 = vmul.f32 %v1567, %v1567
  %v1652 = vmul.f32 %v1568, %v1568
  %v1653 = vmul.f32 %v1569, %v1569
  %v1654 = vmul.f32 %v1570, %v1570
  %v1655 = vmul.f32 %v1571, %v1571
  %v1656 = vmul.f32 %v1572, %v1572
  %v1657 = vmul.f32 %v1573, %v1573
  %v1658 = vmul.f32 %v1574, %v1574
  %v1659 = vmul.f32 %v1575, %v1575
  %v1660 = vmul.f32 %v1576, %v1576
  %v1661 = vmul.f32 %v1577, %v1577
  %v1662 = vmul.f32 %v1578, %v1578
  %v1663 = vmul.f32 %v1579, %v1579
  %v1664 = vmul.f32 %v1580, %v1580
  %v1665 = vmul.f32 %v1581, %v1581
  %v1666 = vmul.f32 %v1582, %v1582
  %v1667 = vmul.f32 %v1583, %v1583
  %v1668 = vmul.f32 %v1584, %v1584
  %v1669 = vmul.f32 %v1585, %v1585
  %v1670 = vmul.f32 %v1586, %v1586
  %v1671 = vmul.f32 %v1587, %v1587
  %v1672 = vmul.f32 %v1588, %v1588
  %v1673 = vmul.f32 %v1589, %v1589
  %v1674 = vmul.f32 %v1590, %v1590
  %v1675 = vmul.f32 %v1591, %v1591
  %v1676 = vmul.f32 %v1592, %v1592
  %v1677 = vmul.f32 %v1593, %v1593
  %v1678 = vmul.f32 %v1594, %v1594
  %v1679 = vmul.f32 %v1595, %v1595
  %v1680 = vmul.f32 %v1596, %v1596
  %v1681 = vmul.f32 %v1597, %v1597
  %v1682 = vmul.f32 %v1598, %v1598
  %v1683 = vmul.f32 %v1599, %v1599
  %v1684 = vmul.f32 %v1600, %v1600
  %v1685 = vmul.f32 %v1601, %v1601
  %v1686 = vmul.f32 %v1602, %v1602
  %v1687 = vmul.f32 %v1603, %v1603
  %v1688 = vmul.f32 %v1604, %v1604
  %v1689 = vmul.f32 %v1605, %v1605
  %v1690 = vmul.f32 %v1606, %v1606
  %v1691 = vmul.f32 %v1607, %v1607
  %v1692 = vmul.f32 %v1608, %v1608
  %v1693 = vmul.f32 %v1609, %v1609
  %v1694 = vmul.f32 %v1610, %v1610
  %v1695 = vmul.f32 %v1611, %v1611
  %v1696 = vmul.f32 %v1612, %v1612
  %v1697 = vmul.f32 %v1613, %v1613
  %v1698 = vmul.f32 %v1614, %v1614
  %v1699 = vmul.f32 %v1615, %v1615
  %v1700 = vmul.f32 %v1616, %v1616
  %v1701 = vmul.f32 %v1617, %v1617
  %v1702 = vmul.f32 %v1618, %v1618
  %v1703 = vsel %vm1324, %v1620, 0.0
  %v1704 = vadd.f32 %v1619, %v1703
  %1705 = vadd.xlane.f32.xlu0 %v1704
  %v1706 = vpop.xlane.xlu0 %1705
  %v1707 = vsel %vm1324, %v1622, 0.0
  %v1708 = vadd.f32 %v1621, %v1707
  %1709 = vadd.xlane.f32.xlu0 %v1708
  %v1710 = vpop.xlane.xlu0 %1709
  %v1711 = vsel %vm1324, %v1624, 0.0
  %v1712 = vadd.f32 %v1623, %v1711
  %1713 = vadd.xlane.f32.xlu0 %v1712
  %v1714 = vpop.xlane.xlu0 %1713
  %v1715 = vsel %vm1324, %v1626, 0.0
  %v1716 = vadd.f32 %v1625, %v1715
  %1717 = vadd.xlane.f32.xlu0 %v1716
  %v1718 = vpop.xlane.xlu0 %1717
  %v1719 = vsel %vm1324, %v1628, 0.0
  %v1720 = vadd.f32 %v1627, %v1719
  %1721 = vadd.xlane.f32.xlu0 %v1720
  %v1722 = vpop.xlane.xlu0 %1721
  %v1723 = vsel %vm1324, %v1630, 0.0
  %v1724 = vadd.f32 %v1629, %v1723
  %1725 = vadd.xlane.f32.xlu0 %v1724
  %v1726 = vpop.xlane.xlu0 %1725
  %v1727 = vsel %vm1324, %v1632, 0.0
  %v1728 = vadd.f32 %v1631, %v1727
  %1729 = vadd.xlane.f32.xlu0 %v1728
  %v1730 = vpop.xlane.xlu0 %1729
  %v1731 = vsel %vm1324, %v1634, 0.0
  %v1732 = vadd.f32 %v1633, %v1731
  %1733 = vadd.xlane.f32.xlu0 %v1732
  %v1734 = vpop.xlane.xlu0 %1733
  %v1735 = vsel %vm1324, %v1636, 0.0
  %v1736 = vadd.f32 %v1635, %v1735
  %1737 = vadd.xlane.f32.xlu0 %v1736
  %v1738 = vpop.xlane.xlu0 %1737
  %v1739 = vsel %vm1324, %v1638, 0.0
  %v1740 = vadd.f32 %v1637, %v1739
  %1741 = vadd.xlane.f32.xlu0 %v1740
  %v1742 = vpop.xlane.xlu0 %1741
  %v1743 = vsel %vm1324, %v1640, 0.0
  %v1744 = vadd.f32 %v1639, %v1743
  %1745 = vadd.xlane.f32.xlu0 %v1744
  %v1746 = vpop.xlane.xlu0 %1745
  %v1747 = vsel %vm1324, %v1642, 0.0
  %v1748 = vadd.f32 %v1641, %v1747
  %1749 = vadd.xlane.f32.xlu0 %v1748
  %v1750 = vpop.xlane.xlu0 %1749
  %v1751 = vsel %vm1324, %v1644, 0.0
  %v1752 = vadd.f32 %v1643, %v1751
  %1753 = vadd.xlane.f32.xlu0 %v1752
  %v1754 = vpop.xlane.xlu0 %1753
  %v1755 = vsel %vm1324, %v1646, 0.0
  %v1756 = vadd.f32 %v1645, %v1755
  %1757 = vadd.xlane.f32.xlu0 %v1756
  %v1758 = vpop.xlane.xlu0 %1757
  %v1759 = vsel %vm1324, %v1648, 0.0
  %v1760 = vadd.f32 %v1647, %v1759
  %1761 = vadd.xlane.f32.xlu0 %v1760
  %v1762 = vpop.xlane.xlu0 %1761
  %v1763 = vsel %vm1324, %v1650, 0.0
  %v1764 = vadd.f32 %v1649, %v1763
  %1765 = vadd.xlane.f32.xlu0 %v1764
  %v1766 = vpop.xlane.xlu0 %1765
  %v1767 = vsel %vm1324, %v1652, 0.0
  %v1768 = vadd.f32 %v1651, %v1767
  %1769 = vadd.xlane.f32.xlu0 %v1768
  %v1770 = vpop.xlane.xlu0 %1769
  %v1771 = vsel %vm1324, %v1654, 0.0
  %v1772 = vadd.f32 %v1653, %v1771
  %1773 = vadd.xlane.f32.xlu0 %v1772
  %v1774 = vpop.xlane.xlu0 %1773
  %v1775 = vsel %vm1324, %v1656, 0.0
  %v1776 = vadd.f32 %v1655, %v1775
  %1777 = vadd.xlane.f32.xlu0 %v1776
  %v1778 = vpop.xlane.xlu0 %1777
  %v1779 = vsel %vm1324, %v1658, 0.0
  %v1780 = vadd.f32 %v1657, %v1779
  %1781 = vadd.xlane.f32.xlu0 %v1780
  %v1782 = vpop.xlane.xlu0 %1781
  %v1783 = vsel %vm1324, %v1660, 0.0
  %v1784 = vadd.f32 %v1659, %v1783
  %1785 = vadd.xlane.f32.xlu0 %v1784
  %v1786 = vpop.xlane.xlu0 %1785
  %v1787 = vsel %vm1324, %v1662, 0.0
  %v1788 = vadd.f32 %v1661, %v1787
  %1789 = vadd.xlane.f32.xlu0 %v1788
  %v1790 = vpop.xlane.xlu0 %1789
  %v1791 = vsel %vm1324, %v1664, 0.0
  %v1792 = vadd.f32 %v1663, %v1791
  %1793 = vadd.xlane.f32.xlu0 %v1792
  %v1794 = vpop.xlane.xlu0 %1793
  %v1795 = vsel %vm1324, %v1666, 0.0
  %v1796 = vadd.f32 %v1665, %v1795
  %1797 = vadd.xlane.f32.xlu0 %v1796
  %v1798 = vpop.xlane.xlu0 %1797
  %v1799 = vsel %vm1324, %v1668, 0.0
  %v1800 = vadd.f32 %v1667, %v1799
  %1801 = vadd.xlane.f32.xlu0 %v1800
  %v1802 = vpop.xlane.xlu0 %1801
  %v1803 = vsel %vm1324, %v1670, 0.0
  %v1804 = vadd.f32 %v1669, %v1803
  %1805 = vadd.xlane.f32.xlu0 %v1804
  %v1806 = vpop.xlane.xlu0 %1805
  %v1807 = vsel %vm1324, %v1672, 0.0
  %v1808 = vadd.f32 %v1671, %v1807
  %1809 = vadd.xlane.f32.xlu0 %v1808
  %v1810 = vpop.xlane.xlu0 %1809
  %v1811 = vsel %vm1324, %v1674, 0.0
  %v1812 = vadd.f32 %v1673, %v1811
  %1813 = vadd.xlane.f32.xlu0 %v1812
  %v1814 = vpop.xlane.xlu0 %1813
  %v1815 = vsel %vm1324, %v1676, 0.0
  %v1816 = vadd.f32 %v1675, %v1815
  %1817 = vadd.xlane.f32.xlu0 %v1816
  %v1818 = vpop.xlane.xlu0 %1817
  %v1819 = vsel %vm1324, %v1678, 0.0
  %v1820 = vadd.f32 %v1677, %v1819
  %1821 = vadd.xlane.f32.xlu0 %v1820
  %v1822 = vpop.xlane.xlu0 %1821
  %v1823 = vsel %vm1324, %v1680, 0.0
  %v1824 = vadd.f32 %v1679, %v1823
  %1825 = vadd.xlane.f32.xlu0 %v1824
  %v1826 = vpop.xlane.xlu0 %1825
  %v1827 = vsel %vm1324, %v1682, 0.0
  %v1828 = vadd.f32 %v1681, %v1827
  %1829 = vadd.xlane.f32.xlu0 %v1828
  %v1830 = vpop.xlane.xlu0 %1829
  %v1831 = vsel %vm1324, %v1684, 0.0
  %v1832 = vadd.f32 %v1683, %v1831
  %1833 = vadd.xlane.f32.xlu0 %v1832
  %v1834 = vpop.xlane.xlu0 %1833
  %v1835 = vsel %vm1324, %v1686, 0.0
  %v1836 = vadd.f32 %v1685, %v1835
  %1837 = vadd.xlane.f32.xlu0 %v1836
  %v1838 = vpop.xlane.xlu0 %1837
  %v1839 = vsel %vm1324, %v1688, 0.0
  %v1840 = vadd.f32 %v1687, %v1839
  %1841 = vadd.xlane.f32.xlu0 %v1840
  %v1842 = vpop.xlane.xlu0 %1841
  %v1843 = vsel %vm1324, %v1690, 0.0
  %v1844 = vadd.f32 %v1689, %v1843
  %1845 = vadd.xlane.f32.xlu0 %v1844
  %v1846 = vpop.xlane.xlu0 %1845
  %v1847 = vsel %vm1324, %v1692, 0.0
  %v1848 = vadd.f32 %v1691, %v1847
  %1849 = vadd.xlane.f32.xlu0 %v1848
  %v1850 = vpop.xlane.xlu0 %1849
  %v1851 = vsel %vm1324, %v1694, 0.0
  %v1852 = vadd.f32 %v1693, %v1851
  %1853 = vadd.xlane.f32.xlu0 %v1852
  %v1854 = vpop.xlane.xlu0 %1853
  %v1855 = vsel %vm1324, %v1696, 0.0
  %v1856 = vadd.f32 %v1695, %v1855
  %1857 = vadd.xlane.f32.xlu0 %v1856
  %v1858 = vpop.xlane.xlu0 %1857
  %v1859 = vsel %vm1324, %v1698, 0.0
  %v1860 = vadd.f32 %v1697, %v1859
  %1861 = vadd.xlane.f32.xlu0 %v1860
  %v1862 = vpop.xlane.xlu0 %1861
  %v1863 = vsel %vm1324, %v1700, 0.0
  %v1864 = vadd.f32 %v1699, %v1863
  %1865 = vadd.xlane.f32.xlu0 %v1864
  %v1866 = vpop.xlane.xlu0 %1865
  %v1867 = vsel %vm1324, %v1702, 0.0
  %v1868 = vadd.f32 %v1701, %v1867
  %1869 = vadd.xlane.f32.xlu0 %v1868
  %v1870 = vpop.xlane.xlu0 %1869
  %v1871 = vmul.f32 %v1706, 0.0051020407
  %v1872 = vmul.f32 %v1710, 0.0051020407
  %v1873 = vmul.f32 %v1714, 0.0051020407
  %v1874 = vmul.f32 %v1718, 0.0051020407
  %v1875 = vmul.f32 %v1722, 0.0051020407
  %v1876 = vmul.f32 %v1726, 0.0051020407
  %v1877 = vmul.f32 %v1730, 0.0051020407
  %v1878 = vmul.f32 %v1734, 0.0051020407
  %v1879 = vmul.f32 %v1738, 0.0051020407
  %v1880 = vmul.f32 %v1742, 0.0051020407
  %v1881 = vmul.f32 %v1746, 0.0051020407
  %v1882 = vmul.f32 %v1750, 0.0051020407
  %v1883 = vmul.f32 %v1754, 0.0051020407
  %v1884 = vmul.f32 %v1758, 0.0051020407
  %v1885 = vmul.f32 %v1762, 0.0051020407
  %v1886 = vmul.f32 %v1766, 0.0051020407
  %v1887 = vmul.f32 %v1770, 0.0051020407
  %v1888 = vmul.f32 %v1774, 0.0051020407
  %v1889 = vmul.f32 %v1778, 0.0051020407
  %v1890 = vmul.f32 %v1782, 0.0051020407
  %v1891 = vmul.f32 %v1786, 0.0051020407
  %v1892 = vmul.f32 %v1790, 0.0051020407
  %v1893 = vmul.f32 %v1794, 0.0051020407
  %v1894 = vmul.f32 %v1798, 0.0051020407
  %v1895 = vmul.f32 %v1802, 0.0051020407
  %v1896 = vmul.f32 %v1806, 0.0051020407
  %v1897 = vmul.f32 %v1810, 0.0051020407
  %v1898 = vmul.f32 %v1814, 0.0051020407
  %v1899 = vmul.f32 %v1818, 0.0051020407
  %v1900 = vmul.f32 %v1822, 0.0051020407
  %v1901 = vmul.f32 %v1826, 0.0051020407
  %v1902 = vmul.f32 %v1830, 0.0051020407
  %v1903 = vmul.f32 %v1834, 0.0051020407
  %v1904 = vmul.f32 %v1838, 0.0051020407
  %v1905 = vmul.f32 %v1842, 0.0051020407
  %v1906 = vmul.f32 %v1846, 0.0051020407
  %v1907 = vmul.f32 %v1850, 0.0051020407
  %v1908 = vmul.f32 %v1854, 0.0051020407
  %v1909 = vmul.f32 %v1858, 0.0051020407
  %v1910 = vmul.f32 %v1862, 0.0051020407
  %v1911 = vmul.f32 %v1866, 0.0051020407
  %v1912 = vmul.f32 %v1870, 0.0051020407
  %v1913 = vadd.f32 %v1871, 1e-05
  %v1914 = vadd.f32 %v1872, 1e-05
  %v1915 = vadd.f32 %v1873, 1e-05
  %v1916 = vadd.f32 %v1874, 1e-05
  %v1917 = vadd.f32 %v1875, 1e-05
  %v1918 = vadd.f32 %v1876, 1e-05
  %v1919 = vadd.f32 %v1877, 1e-05
  %v1920 = vadd.f32 %v1878, 1e-05
  %v1921 = vadd.f32 %v1879, 1e-05
  %v1922 = vadd.f32 %v1880, 1e-05
  %v1923 = vadd.f32 %v1881, 1e-05
  %v1924 = vadd.f32 %v1882, 1e-05
  %v1925 = vadd.f32 %v1883, 1e-05
  %v1926 = vadd.f32 %v1884, 1e-05
  %v1927 = vadd.f32 %v1885, 1e-05
  %v1928 = vadd.f32 %v1886, 1e-05
  %v1929 = vadd.f32 %v1887, 1e-05
  %v1930 = vadd.f32 %v1888, 1e-05
  %v1931 = vadd.f32 %v1889, 1e-05
  %v1932 = vadd.f32 %v1890, 1e-05
  %v1933 = vadd.f32 %v1891, 1e-05
  %v1934 = vadd.f32 %v1892, 1e-05
  %v1935 = vadd.f32 %v1893, 1e-05
  %v1936 = vadd.f32 %v1894, 1e-05
  %v1937 = vadd.f32 %v1895, 1e-05
  %v1938 = vadd.f32 %v1896, 1e-05
  %v1939 = vadd.f32 %v1897, 1e-05
  %v1940 = vadd.f32 %v1898, 1e-05
  %v1941 = vadd.f32 %v1899, 1e-05
  %v1942 = vadd.f32 %v1900, 1e-05
  %v1943 = vadd.f32 %v1901, 1e-05
  %v1944 = vadd.f32 %v1902, 1e-05
  %v1945 = vadd.f32 %v1903, 1e-05
  %v1946 = vadd.f32 %v1904, 1e-05
  %v1947 = vadd.f32 %v1905, 1e-05
  %v1948 = vadd.f32 %v1906, 1e-05
  %v1949 = vadd.f32 %v1907, 1e-05
  %v1950 = vadd.f32 %v1908, 1e-05
  %v1951 = vadd.f32 %v1909, 1e-05
  %v1952 = vadd.f32 %v1910, 1e-05
  %v1953 = vadd.f32 %v1911, 1e-05
  %v1954 = vadd.f32 %v1912, 1e-05
  %v1955 = vrsqrt.pop %v1913
  %v1956 = vrsqrt.pop %v1914
  %v1957 = vrsqrt.pop %v1915
  %v1958 = vrsqrt.pop %v1916
  %v1959 = vrsqrt.pop %v1917
  %v1960 = vrsqrt.pop %v1918
  %v1961 = vrsqrt.pop %v1919
  %v1962 = vrsqrt.pop %v1920
  %v1963 = vrsqrt.pop %v1921
  %v1964 = vrsqrt.pop %v1922
  %v1965 = vrsqrt.pop %v1923
  %v1966 = vrsqrt.pop %v1924
  %v1967 = vrsqrt.pop %v1925
  %v1968 = vrsqrt.pop %v1926
  %v1969 = vrsqrt.pop %v1927
  %v1970 = vrsqrt.pop %v1928
  %v1971 = vrsqrt.pop %v1929
  %v1972 = vrsqrt.pop %v1930
  %v1973 = vrsqrt.pop %v1931
  %v1974 = vrsqrt.pop %v1932
  %v1975 = vrsqrt.pop %v1933
  %v1976 = vrsqrt.pop %v1934
  %v1977 = vrsqrt.pop %v1935
  %v1978 = vrsqrt.pop %v1936
  %v1979 = vrsqrt.pop %v1937
  %v1980 = vrsqrt.pop %v1938
  %v1981 = vrsqrt.pop %v1939
  %v1982 = vrsqrt.pop %v1940
  %v1983 = vrsqrt.pop %v1941
  %v1984 = vrsqrt.pop %v1942
  %v1985 = vrsqrt.pop %v1943
  %v1986 = vrsqrt.pop %v1944
  %v1987 = vrsqrt.pop %v1945
  %v1988 = vrsqrt.pop %v1946
  %v1989 = vrsqrt.pop %v1947
  %v1990 = vrsqrt.pop %v1948
  %v1991 = vrsqrt.pop %v1949
  %v1992 = vrsqrt.pop %v1950
  %v1993 = vrsqrt.pop %v1951
  %v1994 = vrsqrt.pop %v1952
  %v1995 = vrsqrt.pop %v1953
  %v1996 = vrsqrt.pop %v1954
  %v1997 = vmul.f32 %v1535, %v1955
  %v1998 = vmul.f32 %v1536, %v1955
  %v1999 = vmul.f32 %v1537, %v1956
  %v2000 = vmul.f32 %v1538, %v1956
  %v2001 = vmul.f32 %v1539, %v1957
  %v2002 = vmul.f32 %v1540, %v1957
  %v2003 = vmul.f32 %v1541, %v1958
  %v2004 = vmul.f32 %v1542, %v1958
  %v2005 = vmul.f32 %v1543, %v1959
  %v2006 = vmul.f32 %v1544, %v1959
  %v2007 = vmul.f32 %v1545, %v1960
  %v2008 = vmul.f32 %v1546, %v1960
  %v2009 = vmul.f32 %v1547, %v1961
  %v2010 = vmul.f32 %v1548, %v1961
  %v2011 = vmul.f32 %v1549, %v1962
  %v2012 = vmul.f32 %v1550, %v1962
  %v2013 = vmul.f32 %v1551, %v1963
  %v2014 = vmul.f32 %v1552, %v1963
  %v2015 = vmul.f32 %v1553, %v1964
  %v2016 = vmul.f32 %v1554, %v1964
  %v2017 = vmul.f32 %v1555, %v1965
  %v2018 = vmul.f32 %v1556, %v1965
  %v2019 = vmul.f32 %v1557, %v1966
  %v2020 = vmul.f32 %v1558, %v1966
  %v2021 = vmul.f32 %v1559, %v1967
  %v2022 = vmul.f32 %v1560, %v1967
  %v2023 = vmul.f32 %v1561, %v1968
  %v2024 = vmul.f32 %v1562, %v1968
  %v2025 = vmul.f32 %v1563, %v1969
  %v2026 = vmul.f32 %v1564, %v1969
  %v2027 = vmul.f32 %v1565, %v1970
  %v2028 = vmul.f32 %v1566, %v1970
  %v2029 = vmul.f32 %v1567, %v1971
  %v2030 = vmul.f32 %v1568, %v1971
  %v2031 = vmul.f32 %v1569, %v1972
  %v2032 = vmul.f32 %v1570, %v1972
  %v2033 = vmul.f32 %v1571, %v1973
  %v2034 = vmul.f32 %v1572, %v1973
  %v2035 = vmul.f32 %v1573, %v1974
  %v2036 = vmul.f32 %v1574, %v1974
  %v2037 = vmul.f32 %v1575, %v1975
  %v2038 = vmul.f32 %v1576, %v1975
  %v2039 = vmul.f32 %v1577, %v1976
  %v2040 = vmul.f32 %v1578, %v1976
  %v2041 = vmul.f32 %v1579, %v1977
  %v2042 = vmul.f32 %v1580, %v1977
  %v2043 = vmul.f32 %v1581, %v1978
  %v2044 = vmul.f32 %v1582, %v1978
  %v2045 = vmul.f32 %v1583, %v1979
  %v2046 = vmul.f32 %v1584, %v1979
  %v2047 = vmul.f32 %v1585, %v1980
  %v2048 = vmul.f32 %v1586, %v1980
  %v2049 = vmul.f32 %v1587, %v1981
  %v2050 = vmul.f32 %v1588, %v1981
  %v2051 = vmul.f32 %v1589, %v1982
  %v2052 = vmul.f32 %v1590, %v1982
  %v2053 = vmul.f32 %v1591, %v1983
  %v2054 = vmul.f32 %v1592, %v1983
  %v2055 = vmul.f32 %v1593, %v1984
  %v2056 = vmul.f32 %v1594, %v1984
  %v2057 = vmul.f32 %v1595, %v1985
  %v2058 = vmul.f32 %v1596, %v1985
  %v2059 = vmul.f32 %v1597, %v1986
  %v2060 = vmul.f32 %v1598, %v1986
  %v2061 = vmul.f32 %v1599, %v1987
  %v2062 = vmul.f32 %v1600, %v1987
  %v2063 = vmul.f32 %v1601, %v1988
  %v2064 = vmul.f32 %v1602, %v1988
  %v2065 = vmul.f32 %v1603, %v1989
  %v2066 = vmul.f32 %v1604, %v1989
  %v2067 = vmul.f32 %v1605, %v1990
  %v2068 = vmul.f32 %v1606, %v1990
  %v2069 = vmul.f32 %v1607, %v1991
  %v2070 = vmul.f32 %v1608, %v1991
  %v2071 = vmul.f32 %v1609, %v1992
  %v2072 = vmul.f32 %v1610, %v1992
  %v2073 = vmul.f32 %v1611, %v1993
  %v2074 = vmul.f32 %v1612, %v1993
  %v2075 = vmul.f32 %v1613, %v1994
  %v2076 = vmul.f32 %v1614, %v1994
  %v2077 = vmul.f32 %v1615, %v1995
  %v2078 = vmul.f32 %v1616, %v1995
  %v2079 = vmul.f32 %v1617, %v1996
  %v2080 = vmul.f32 %v1618, %v1996
  %2081 = vset.pattern.permute.xlu0 1
  %2082 = vperm.xlu0 %2081, %v17
  %v2083 = vpop.permute.xlu0 %2082
  %2085 = vset.pattern.permute.xlu0 1
  %2086 = vperm.xlu0 %2085, %v18
  %v2087 = vpop.permute.xlu0 %2086
  %2089 = vset.pattern.permute.xlu0 1
  %2090 = vperm.xlu0 %2089, %v19
  %v2091 = vpop.permute.xlu0 %2090
  %2093 = vset.pattern.permute.xlu0 1
  %2094 = vperm.xlu0 %2093, %v20
  %v2095 = vpop.permute.xlu0 %2094
  %2097 = vset.pattern.permute.xlu0 1
  %2098 = vperm.xlu0 %2097, %v21
  %v2099 = vpop.permute.xlu0 %2098
  %2101 = vset.pattern.permute.xlu0 1
  %2102 = vperm.xlu0 %2101, %v22
  %v2103 = vpop.permute.xlu0 %2102
  %2105 = vset.pattern.permute.xlu0 1
  %2106 = vperm.xlu0 %2105, %v23
  %v2107 = vpop.permute.xlu0 %2106
  %2109 = vset.pattern.permute.xlu0 1
  %2110 = vperm.xlu0 %2109, %v24
  %v2111 = vpop.permute.xlu0 %2110
  %2113 = vset.pattern.permute.xlu0 1
  %2114 = vperm.xlu0 %2113, %v25
  %v2115 = vpop.permute.xlu0 %2114
  %2117 = vset.pattern.permute.xlu0 1
  %2118 = vperm.xlu0 %2117, %v26
  %v2119 = vpop.permute.xlu0 %2118
  %2121 = vset.pattern.permute.xlu0 1
  %2122 = vperm.xlu0 %2121, %v27
  %v2123 = vpop.permute.xlu0 %2122
  %2125 = vset.pattern.permute.xlu0 1
  %2126 = vperm.xlu0 %2125, %v28
  %v2127 = vpop.permute.xlu0 %2126
  %2129 = vset.pattern.permute.xlu0 1
  %2130 = vperm.xlu0 %2129, %v29
  %v2131 = vpop.permute.xlu0 %2130
  %2133 = vset.pattern.permute.xlu0 1
  %2134 = vperm.xlu0 %2133, %v30
  %v2135 = vpop.permute.xlu0 %2134
  %2137 = vset.pattern.permute.xlu0 1
  %2138 = vperm.xlu0 %2137, %v31
  %v2139 = vpop.permute.xlu0 %2138
  %2141 = vset.pattern.permute.xlu0 1
  %2142 = vperm.xlu0 %2141, %v32
  %v2143 = vpop.permute.xlu0 %2142
  %2145 = vset.pattern.permute.xlu0 1
  %2146 = vperm.xlu0 %2145, %v33
  %v2147 = vpop.permute.xlu0 %2146
  %2149 = vset.pattern.permute.xlu0 1
  %2150 = vperm.xlu0 %2149, %v34
  %v2151 = vpop.permute.xlu0 %2150
  %2153 = vset.pattern.permute.xlu0 1
  %2154 = vperm.xlu0 %2153, %v35
  %v2155 = vpop.permute.xlu0 %2154
  %2157 = vset.pattern.permute.xlu0 1
  %2158 = vperm.xlu0 %2157, %v36
  %v2159 = vpop.permute.xlu0 %2158
  %2161 = vset.pattern.permute.xlu0 1
  %2162 = vperm.xlu0 %2161, %v37
  %v2163 = vpop.permute.xlu0 %2162
  %2165 = vset.pattern.permute.xlu0 1
  %2166 = vperm.xlu0 %2165, %v38
  %v2167 = vpop.permute.xlu0 %2166
  %2169 = vset.pattern.permute.xlu0 1
  %2170 = vperm.xlu0 %2169, %v39
  %v2171 = vpop.permute.xlu0 %2170
  %2173 = vset.pattern.permute.xlu0 1
  %2174 = vperm.xlu0 %2173, %v40
  %v2175 = vpop.permute.xlu0 %2174
  %2177 = vset.pattern.permute.xlu0 1
  %2178 = vperm.xlu0 %2177, %v41
  %v2179 = vpop.permute.xlu0 %2178
  %2181 = vset.pattern.permute.xlu0 1
  %2182 = vperm.xlu0 %2181, %v42
  %v2183 = vpop.permute.xlu0 %2182
  %2185 = vset.pattern.permute.xlu0 1
  %2186 = vperm.xlu0 %2185, %v43
  %v2187 = vpop.permute.xlu0 %2186
  %2189 = vset.pattern.permute.xlu0 1
  %2190 = vperm.xlu0 %2189, %v44
  %v2191 = vpop.permute.xlu0 %2190
  %2193 = vset.pattern.permute.xlu0 1
  %2194 = vperm.xlu0 %2193, %v45
  %v2195 = vpop.permute.xlu0 %2194
  %2197 = vset.pattern.permute.xlu0 1
  %2198 = vperm.xlu0 %2197, %v46
  %v2199 = vpop.permute.xlu0 %2198
  %2201 = vset.pattern.permute.xlu0 1
  %2202 = vperm.xlu0 %2201, %v47
  %v2203 = vpop.permute.xlu0 %2202
  %2205 = vset.pattern.permute.xlu0 1
  %2206 = vperm.xlu0 %2205, %v48
  %v2207 = vpop.permute.xlu0 %2206
  %2209 = vset.pattern.permute.xlu0 1
  %2210 = vperm.xlu0 %2209, %v49
  %v2211 = vpop.permute.xlu0 %2210
  %2213 = vset.pattern.permute.xlu0 1
  %2214 = vperm.xlu0 %2213, %v50
  %v2215 = vpop.permute.xlu0 %2214
  %2217 = vset.pattern.permute.xlu0 1
  %2218 = vperm.xlu0 %2217, %v51
  %v2219 = vpop.permute.xlu0 %2218
  %2221 = vset.pattern.permute.xlu0 1
  %2222 = vperm.xlu0 %2221, %v52
  %v2223 = vpop.permute.xlu0 %2222
  %2225 = vset.pattern.permute.xlu0 1
  %2226 = vperm.xlu0 %2225, %v53
  %v2227 = vpop.permute.xlu0 %2226
  %2229 = vset.pattern.permute.xlu0 1
  %2230 = vperm.xlu0 %2229, %v54
  %v2231 = vpop.permute.xlu0 %2230
  %2233 = vset.pattern.permute.xlu0 1
  %2234 = vperm.xlu0 %2233, %v55
  %v2235 = vpop.permute.xlu0 %2234
  %2237 = vset.pattern.permute.xlu0 1
  %2238 = vperm.xlu0 %2237, %v56
  %v2239 = vpop.permute.xlu0 %2238
  %2241 = vset.pattern.permute.xlu0 1
  %2242 = vperm.xlu0 %2241, %v57
  %v2243 = vpop.permute.xlu0 %2242
  %2245 = vset.pattern.permute.xlu0 1
  %2246 = vperm.xlu0 %2245, %v58
  %v2247 = vpop.permute.xlu0 %2246
  %v2249 = vmul.f32 %v2083, %v1997
  %v2250 = vmul.f32 %v2083, %v1998
  %v2251 = vmul.f32 %v2087, %v1999
  %v2252 = vmul.f32 %v2087, %v2000
  %v2253 = vmul.f32 %v2091, %v2001
  %v2254 = vmul.f32 %v2091, %v2002
  %v2255 = vmul.f32 %v2095, %v2003
  %v2256 = vmul.f32 %v2095, %v2004
  %v2257 = vmul.f32 %v2099, %v2005
  %v2258 = vmul.f32 %v2099, %v2006
  %v2259 = vmul.f32 %v2103, %v2007
  %v2260 = vmul.f32 %v2103, %v2008
  %v2261 = vmul.f32 %v2107, %v2009
  %v2262 = vmul.f32 %v2107, %v2010
  %v2263 = vmul.f32 %v2111, %v2011
  %v2264 = vmul.f32 %v2111, %v2012
  %v2265 = vmul.f32 %v2115, %v2013
  %v2266 = vmul.f32 %v2115, %v2014
  %v2267 = vmul.f32 %v2119, %v2015
  %v2268 = vmul.f32 %v2119, %v2016
  %v2269 = vmul.f32 %v2123, %v2017
  %v2270 = vmul.f32 %v2123, %v2018
  %v2271 = vmul.f32 %v2127, %v2019
  %v2272 = vmul.f32 %v2127, %v2020
  %v2273 = vmul.f32 %v2131, %v2021
  %v2274 = vmul.f32 %v2131, %v2022
  %v2275 = vmul.f32 %v2135, %v2023
  %v2276 = vmul.f32 %v2135, %v2024
  %v2277 = vmul.f32 %v2139, %v2025
  %v2278 = vmul.f32 %v2139, %v2026
  %v2279 = vmul.f32 %v2143, %v2027
  %v2280 = vmul.f32 %v2143, %v2028
  %v2281 = vmul.f32 %v2147, %v2029
  %v2282 = vmul.f32 %v2147, %v2030
  %v2283 = vmul.f32 %v2151, %v2031
  %v2284 = vmul.f32 %v2151, %v2032
  %v2285 = vmul.f32 %v2155, %v2033
  %v2286 = vmul.f32 %v2155, %v2034
  %v2287 = vmul.f32 %v2159, %v2035
  %v2288 = vmul.f32 %v2159, %v2036
  %v2289 = vmul.f32 %v2163, %v2037
  %v2290 = vmul.f32 %v2163, %v2038
  %v2291 = vmul.f32 %v2167, %v2039
  %v2292 = vmul.f32 %v2167, %v2040
  %v2293 = vmul.f32 %v2171, %v2041
  %v2294 = vmul.f32 %v2171, %v2042
  %v2295 = vmul.f32 %v2175, %v2043
  %v2296 = vmul.f32 %v2175, %v2044
  %v2297 = vmul.f32 %v2179, %v2045
  %v2298 = vmul.f32 %v2179, %v2046
  %v2299 = vmul.f32 %v2183, %v2047
  %v2300 = vmul.f32 %v2183, %v2048
  %v2301 = vmul.f32 %v2187, %v2049
  %v2302 = vmul.f32 %v2187, %v2050
  %v2303 = vmul.f32 %v2191, %v2051
  %v2304 = vmul.f32 %v2191, %v2052
  %v2305 = vmul.f32 %v2195, %v2053
  %v2306 = vmul.f32 %v2195, %v2054
  %v2307 = vmul.f32 %v2199, %v2055
  %v2308 = vmul.f32 %v2199, %v2056
  %v2309 = vmul.f32 %v2203, %v2057
  %v2310 = vmul.f32 %v2203, %v2058
  %v2311 = vmul.f32 %v2207, %v2059
  %v2312 = vmul.f32 %v2207, %v2060
  %v2313 = vmul.f32 %v2211, %v2061
  %v2314 = vmul.f32 %v2211, %v2062
  %v2315 = vmul.f32 %v2215, %v2063
  %v2316 = vmul.f32 %v2215, %v2064
  %v2317 = vmul.f32 %v2219, %v2065
  %v2318 = vmul.f32 %v2219, %v2066
  %v2319 = vmul.f32 %v2223, %v2067
  %v2320 = vmul.f32 %v2223, %v2068
  %v2321 = vmul.f32 %v2227, %v2069
  %v2322 = vmul.f32 %v2227, %v2070
  %v2323 = vmul.f32 %v2231, %v2071
  %v2324 = vmul.f32 %v2231, %v2072
  %v2325 = vmul.f32 %v2235, %v2073
  %v2326 = vmul.f32 %v2235, %v2074
  %v2327 = vmul.f32 %v2239, %v2075
  %v2328 = vmul.f32 %v2239, %v2076
  %v2329 = vmul.f32 %v2243, %v2077
  %v2330 = vmul.f32 %v2243, %v2078
  %v2331 = vmul.f32 %v2247, %v2079
  %v2332 = vmul.f32 %v2247, %v2080
  %2333 = vset.pattern.permute.xlu0 2
  %2334 = vperm.xlu0 %2333, %v17
  %v2335 = vpop.permute.xlu0 %2334
  %2337 = vset.pattern.permute.xlu0 2
  %2338 = vperm.xlu0 %2337, %v18
  %v2339 = vpop.permute.xlu0 %2338
  %2341 = vset.pattern.permute.xlu0 2
  %2342 = vperm.xlu0 %2341, %v19
  %v2343 = vpop.permute.xlu0 %2342
  %2345 = vset.pattern.permute.xlu0 2
  %2346 = vperm.xlu0 %2345, %v20
  %v2347 = vpop.permute.xlu0 %2346
  %2349 = vset.pattern.permute.xlu0 2
  %2350 = vperm.xlu0 %2349, %v21
  %v2351 = vpop.permute.xlu0 %2350
  %2353 = vset.pattern.permute.xlu0 2
  %2354 = vperm.xlu0 %2353, %v22
  %v2355 = vpop.permute.xlu0 %2354
  %2357 = vset.pattern.permute.xlu0 2
  %2358 = vperm.xlu0 %2357, %v23
  %v2359 = vpop.permute.xlu0 %2358
  %2361 = vset.pattern.permute.xlu0 2
  %2362 = vperm.xlu0 %2361, %v24
  %v2363 = vpop.permute.xlu0 %2362
  %2365 = vset.pattern.permute.xlu0 2
  %2366 = vperm.xlu0 %2365, %v25
  %v2367 = vpop.permute.xlu0 %2366
  %2369 = vset.pattern.permute.xlu0 2
  %2370 = vperm.xlu0 %2369, %v26
  %v2371 = vpop.permute.xlu0 %2370
  %2373 = vset.pattern.permute.xlu0 2
  %2374 = vperm.xlu0 %2373, %v27
  %v2375 = vpop.permute.xlu0 %2374
  %2377 = vset.pattern.permute.xlu0 2
  %2378 = vperm.xlu0 %2377, %v28
  %v2379 = vpop.permute.xlu0 %2378
  %2381 = vset.pattern.permute.xlu0 2
  %2382 = vperm.xlu0 %2381, %v29
  %v2383 = vpop.permute.xlu0 %2382
  %2385 = vset.pattern.permute.xlu0 2
  %2386 = vperm.xlu0 %2385, %v30
  %v2387 = vpop.permute.xlu0 %2386
  %2389 = vset.pattern.permute.xlu0 2
  %2390 = vperm.xlu0 %2389, %v31
  %v2391 = vpop.permute.xlu0 %2390
  %2393 = vset.pattern.permute.xlu0 2
  %2394 = vperm.xlu0 %2393, %v32
  %v2395 = vpop.permute.xlu0 %2394
  %2397 = vset.pattern.permute.xlu0 2
  %2398 = vperm.xlu0 %2397, %v33
  %v2399 = vpop.permute.xlu0 %2398
  %2401 = vset.pattern.permute.xlu0 2
  %2402 = vperm.xlu0 %2401, %v34
  %v2403 = vpop.permute.xlu0 %2402
  %2405 = vset.pattern.permute.xlu0 2
  %2406 = vperm.xlu0 %2405, %v35
  %v2407 = vpop.permute.xlu0 %2406
  %2409 = vset.pattern.permute.xlu0 2
  %2410 = vperm.xlu0 %2409, %v36
  %v2411 = vpop.permute.xlu0 %2410
  %2413 = vset.pattern.permute.xlu0 2
  %2414 = vperm.xlu0 %2413, %v37
  %v2415 = vpop.permute.xlu0 %2414
  %2417 = vset.pattern.permute.xlu0 2
  %2418 = vperm.xlu0 %2417, %v38
  %v2419 = vpop.permute.xlu0 %2418
  %2421 = vset.pattern.permute.xlu0 2
  %2422 = vperm.xlu0 %2421, %v39
  %v2423 = vpop.permute.xlu0 %2422
  %2425 = vset.pattern.permute.xlu0 2
  %2426 = vperm.xlu0 %2425, %v40
  %v2427 = vpop.permute.xlu0 %2426
  %2429 = vset.pattern.permute.xlu0 2
  %2430 = vperm.xlu0 %2429, %v41
  %v2431 = vpop.permute.xlu0 %2430
  %2433 = vset.pattern.permute.xlu0 2
  %2434 = vperm.xlu0 %2433, %v42
  %v2435 = vpop.permute.xlu0 %2434
  %2437 = vset.pattern.permute.xlu0 2
  %2438 = vperm.xlu0 %2437, %v43
  %v2439 = vpop.permute.xlu0 %2438
  %2441 = vset.pattern.permute.xlu0 2
  %2442 = vperm.xlu0 %2441, %v44
  %v2443 = vpop.permute.xlu0 %2442
  %2445 = vset.pattern.permute.xlu0 2
  %2446 = vperm.xlu0 %2445, %v45
  %v2447 = vpop.permute.xlu0 %2446
  %2449 = vset.pattern.permute.xlu0 2
  %2450 = vperm.xlu0 %2449, %v46
  %v2451 = vpop.permute.xlu0 %2450
  %2453 = vset.pattern.permute.xlu0 2
  %2454 = vperm.xlu0 %2453, %v47
  %v2455 = vpop.permute.xlu0 %2454
  %2457 = vset.pattern.permute.xlu0 2
  %2458 = vperm.xlu0 %2457, %v48
  %v2459 = vpop.permute.xlu0 %2458
  %2461 = vset.pattern.permute.xlu0 2
  %2462 = vperm.xlu0 %2461, %v49
  %v2463 = vpop.permute.xlu0 %2462
  %2465 = vset.pattern.permute.xlu0 2
  %2466 = vperm.xlu0 %2465, %v50
  %v2467 = vpop.permute.xlu0 %2466
  %2469 = vset.pattern.permute.xlu0 2
  %2470 = vperm.xlu0 %2469, %v51
  %v2471 = vpop.permute.xlu0 %2470
  %2473 = vset.pattern.permute.xlu0 2
  %2474 = vperm.xlu0 %2473, %v52
  %v2475 = vpop.permute.xlu0 %2474
  %2477 = vset.pattern.permute.xlu0 2
  %2478 = vperm.xlu0 %2477, %v53
  %v2479 = vpop.permute.xlu0 %2478
  %2481 = vset.pattern.permute.xlu0 2
  %2482 = vperm.xlu0 %2481, %v54
  %v2483 = vpop.permute.xlu0 %2482
  %2485 = vset.pattern.permute.xlu0 2
  %2486 = vperm.xlu0 %2485, %v55
  %v2487 = vpop.permute.xlu0 %2486
  %2489 = vset.pattern.permute.xlu0 2
  %2490 = vperm.xlu0 %2489, %v56
  %v2491 = vpop.permute.xlu0 %2490
  %2493 = vset.pattern.permute.xlu0 2
  %2494 = vperm.xlu0 %2493, %v57
  %v2495 = vpop.permute.xlu0 %2494
  %2497 = vset.pattern.permute.xlu0 2
  %2498 = vperm.xlu0 %2497, %v58
  %v2499 = vpop.permute.xlu0 %2498
  %v2501 = vadd.f32 %v2249, %v2335
  %v2502 = vadd.f32 %v2250, %v2335
  %v2503 = vadd.f32 %v2251, %v2339
  %v2504 = vadd.f32 %v2252, %v2339
  %v2505 = vadd.f32 %v2253, %v2343
  %v2506 = vadd.f32 %v2254, %v2343
  %v2507 = vadd.f32 %v2255, %v2347
  %v2508 = vadd.f32 %v2256, %v2347
  %v2509 = vadd.f32 %v2257, %v2351
  %v2510 = vadd.f32 %v2258, %v2351
  %v2511 = vadd.f32 %v2259, %v2355
  %v2512 = vadd.f32 %v2260, %v2355
  %v2513 = vadd.f32 %v2261, %v2359
  %v2514 = vadd.f32 %v2262, %v2359
  %v2515 = vadd.f32 %v2263, %v2363
  %v2516 = vadd.f32 %v2264, %v2363
  %v2517 = vadd.f32 %v2265, %v2367
  %v2518 = vadd.f32 %v2266, %v2367
  %v2519 = vadd.f32 %v2267, %v2371
  %v2520 = vadd.f32 %v2268, %v2371
  %v2521 = vadd.f32 %v2269, %v2375
  %v2522 = vadd.f32 %v2270, %v2375
  %v2523 = vadd.f32 %v2271, %v2379
  %v2524 = vadd.f32 %v2272, %v2379
  %v2525 = vadd.f32 %v2273, %v2383
  %v2526 = vadd.f32 %v2274, %v2383
  %v2527 = vadd.f32 %v2275, %v2387
  %v2528 = vadd.f32 %v2276, %v2387
  %v2529 = vadd.f32 %v2277, %v2391
  %v2530 = vadd.f32 %v2278, %v2391
  %v2531 = vadd.f32 %v2279, %v2395
  %v2532 = vadd.f32 %v2280, %v2395
  %v2533 = vadd.f32 %v2281, %v2399
  %v2534 = vadd.f32 %v2282, %v2399
  %v2535 = vadd.f32 %v2283, %v2403
  %v2536 = vadd.f32 %v2284, %v2403
  %v2537 = vadd.f32 %v2285, %v2407
  %v2538 = vadd.f32 %v2286, %v2407
  %v2539 = vadd.f32 %v2287, %v2411
  %v2540 = vadd.f32 %v2288, %v2411
  %v2541 = vadd.f32 %v2289, %v2415
  %v2542 = vadd.f32 %v2290, %v2415
  %v2543 = vadd.f32 %v2291, %v2419
  %v2544 = vadd.f32 %v2292, %v2419
  %v2545 = vadd.f32 %v2293, %v2423
  %v2546 = vadd.f32 %v2294, %v2423
  %v2547 = vadd.f32 %v2295, %v2427
  %v2548 = vadd.f32 %v2296, %v2427
  %v2549 = vadd.f32 %v2297, %v2431
  %v2550 = vadd.f32 %v2298, %v2431
  %v2551 = vadd.f32 %v2299, %v2435
  %v2552 = vadd.f32 %v2300, %v2435
  %v2553 = vadd.f32 %v2301, %v2439
  %v2554 = vadd.f32 %v2302, %v2439
  %v2555 = vadd.f32 %v2303, %v2443
  %v2556 = vadd.f32 %v2304, %v2443
  %v2557 = vadd.f32 %v2305, %v2447
  %v2558 = vadd.f32 %v2306, %v2447
  %v2559 = vadd.f32 %v2307, %v2451
  %v2560 = vadd.f32 %v2308, %v2451
  %v2561 = vadd.f32 %v2309, %v2455
  %v2562 = vadd.f32 %v2310, %v2455
  %v2563 = vadd.f32 %v2311, %v2459
  %v2564 = vadd.f32 %v2312, %v2459
  %v2565 = vadd.f32 %v2313, %v2463
  %v2566 = vadd.f32 %v2314, %v2463
  %v2567 = vadd.f32 %v2315, %v2467
  %v2568 = vadd.f32 %v2316, %v2467
  %v2569 = vadd.f32 %v2317, %v2471
  %v2570 = vadd.f32 %v2318, %v2471
  %v2571 = vadd.f32 %v2319, %v2475
  %v2572 = vadd.f32 %v2320, %v2475
  %v2573 = vadd.f32 %v2321, %v2479
  %v2574 = vadd.f32 %v2322, %v2479
  %v2575 = vadd.f32 %v2323, %v2483
  %v2576 = vadd.f32 %v2324, %v2483
  %v2577 = vadd.f32 %v2325, %v2487
  %v2578 = vadd.f32 %v2326, %v2487
  %v2579 = vadd.f32 %v2327, %v2491
  %v2580 = vadd.f32 %v2328, %v2491
  %v2581 = vadd.f32 %v2329, %v2495
  %v2582 = vadd.f32 %v2330, %v2495
  %v2583 = vadd.f32 %v2331, %v2499
  %v2584 = vadd.f32 %v2332, %v2499
  %v2585 = vld [vmem:[%s3] sm:$0xff]
  %v2586 = vld [vmem:[%s3 + $0x8] sm:$0xff]
  %v2587 = vld [vmem:[%s3 + $0x10] sm:$0xff]
  %v2588 = vld [vmem:[%s3 + $0x18] sm:$0xff]
  %v2589 = vld [vmem:[%s3 + $0x20] sm:$0xff]
  %v2590 = vld [vmem:[%s3 + $0x28] sm:$0xff]
  %v2591 = vld [vmem:[%s3 + $0x30] sm:$0xff]
  %v2592 = vld [vmem:[%s3 + $0x38] sm:$0xff]
  %v2593 = vld [vmem:[%s3 + $0x40] sm:$0xff]
  %v2594 = vld [vmem:[%s3 + $0x48] sm:$0xff]
  %v2595 = vld [vmem:[%s3 + $0x50] sm:$0xff]
  %v2596 = vld [vmem:[%s3 + $0x58] sm:$0xff]
  %v2597 = vld [vmem:[%s3 + $0x60] sm:$0xff]
  %v2598 = vld [vmem:[%s3 + $0x68] sm:$0xff]
  %v2599 = vld [vmem:[%s3 + $0x70] sm:$0xff]
  %v2600 = vld [vmem:[%s3 + $0x78] sm:$0xff]
  %v2601 = vld [vmem:[%s3 + $0x80] sm:$0xff]
  %v2602 = vld [vmem:[%s3 + $0x88] sm:$0xff]
  %v2603 = vld [vmem:[%s3 + $0x90] sm:$0xff]
  %v2604 = vld [vmem:[%s3 + $0x98] sm:$0xff]
  %v2605 = vld [vmem:[%s3 + $0xa0] sm:$0xff]
  %v2606 = vld [vmem:[%s3 + $0xa8] sm:$0xff]
  %v2607 = vld [vmem:[%s3 + $0xb0] sm:$0xff]
  %v2608 = vld [vmem:[%s3 + $0xb8] sm:$0xff]
  %v2609 = vld [vmem:[%s3 + $0xc0] sm:$0xff]
  %v2610 = vld [vmem:[%s3 + $0xc8] sm:$0xff]
  %v2611 = vld [vmem:[%s3 + $0xd0] sm:$0xff]
  %v2612 = vld [vmem:[%s3 + $0xd8] sm:$0xff]
  %v2613 = vld [vmem:[%s3 + $0xe0] sm:$0xff]
  %v2614 = vld [vmem:[%s3 + $0xe8] sm:$0xff]
  %v2615 = vld [vmem:[%s3 + $0xf0] sm:$0xff]
  %v2616 = vld [vmem:[%s3 + $0xf8] sm:$0xff]
  %v2617 = vld [vmem:[%s3 + $0x100] sm:$0xff]
  %v2618 = vld [vmem:[%s3 + $0x108] sm:$0xff]
  %v2619 = vld [vmem:[%s3 + $0x110] sm:$0xff]
  %v2620 = vld [vmem:[%s3 + $0x118] sm:$0xff]
  %v2621 = vld [vmem:[%s3 + $0x120] sm:$0xff]
  %v2622 = vld [vmem:[%s3 + $0x128] sm:$0xff]
  %v2623 = vld [vmem:[%s3 + $0x130] sm:$0xff]
  %v2624 = vld [vmem:[%s3 + $0x138] sm:$0xff]
  %v2625 = vld [vmem:[%s3 + $0x140] sm:$0xff]
  %v2626 = vld [vmem:[%s3 + $0x148] sm:$0xff]
  %v2627 = vld [vmem:[%s3 + $0x150] sm:$0xff]
  %v2628 = vld [vmem:[%s3 + $0x158] sm:$0xff]
  %v2629 = vld [vmem:[%s3 + $0x160] sm:$0xff]
  %v2630 = vld [vmem:[%s3 + $0x168] sm:$0xff]
  %v2631 = vld [vmem:[%s3 + $0x170] sm:$0xff]
  %v2632 = vld [vmem:[%s3 + $0x178] sm:$0xff]
  %v2633 = vld [vmem:[%s3 + $0x180] sm:$0xff]
  %v2634 = vld [vmem:[%s3 + $0x188] sm:$0xff]
  %v2635 = vld [vmem:[%s3 + $0x190] sm:$0xff]
  %v2636 = vld [vmem:[%s3 + $0x198] sm:$0xff]
  %v2637 = vld [vmem:[%s3 + $0x1a0] sm:$0xff]
  %v2638 = vld [vmem:[%s3 + $0x1a8] sm:$0xff]
  %v2639 = vld [vmem:[%s3 + $0x1b0] sm:$0xff]
  %v2640 = vld [vmem:[%s3 + $0x1b8] sm:$0xff]
  %v2641 = vld [vmem:[%s3 + $0x1c0] sm:$0xff]
  %v2642 = vld [vmem:[%s3 + $0x1c8] sm:$0xff]
  %v2643 = vld [vmem:[%s3 + $0x1d0] sm:$0xff]
  %v2644 = vld [vmem:[%s3 + $0x1d8] sm:$0xff]
  %v2645 = vld [vmem:[%s3 + $0x1e0] sm:$0xff]
  %v2646 = vld [vmem:[%s3 + $0x1e8] sm:$0xff]
  %v2647 = vld [vmem:[%s3 + $0x1f0] sm:$0xff]
  %v2648 = vld [vmem:[%s3 + $0x1f8] sm:$0xff]
  %v2649 = vld [vmem:[%s3 + $0x200] sm:$0xff]
  %v2650 = vld [vmem:[%s3 + $0x208] sm:$0xff]
  %v2651 = vld [vmem:[%s3 + $0x210] sm:$0xff]
  %v2652 = vld [vmem:[%s3 + $0x218] sm:$0xff]
  %v2653 = vld [vmem:[%s3 + $0x220] sm:$0xff]
  %v2654 = vld [vmem:[%s3 + $0x228] sm:$0xff]
  %v2655 = vld [vmem:[%s3 + $0x230] sm:$0xff]
  %v2656 = vld [vmem:[%s3 + $0x238] sm:$0xff]
  %v2657 = vld [vmem:[%s3 + $0x240] sm:$0xff]
  %v2658 = vld [vmem:[%s3 + $0x248] sm:$0xff]
  %v2659 = vld [vmem:[%s3 + $0x250] sm:$0xff]
  %v2660 = vld [vmem:[%s3 + $0x258] sm:$0xff]
  %v2661 = vld [vmem:[%s3 + $0x260] sm:$0xff]
  %v2662 = vld [vmem:[%s3 + $0x268] sm:$0xff]
  %v2663 = vld [vmem:[%s3 + $0x270] sm:$0xff]
  %v2664 = vld [vmem:[%s3 + $0x278] sm:$0xff]
  %v2665 = vld [vmem:[%s3 + $0x280] sm:$0xff]
  %v2666 = vld [vmem:[%s3 + $0x288] sm:$0xff]
  %v2667 = vld [vmem:[%s3 + $0x290] sm:$0xff]
  %v2668 = vld [vmem:[%s3 + $0x298] sm:$0xff]
  %v2669 = vadd.f32 %v2585, %v2501
  %v2670 = vadd.f32 %v2586, %v2502
  %v2671 = vadd.f32 %v2587, %v2503
  %v2672 = vadd.f32 %v2588, %v2504
  %v2673 = vadd.f32 %v2589, %v2505
  %v2674 = vadd.f32 %v2590, %v2506
  %v2675 = vadd.f32 %v2591, %v2507
  %v2676 = vadd.f32 %v2592, %v2508
  %v2677 = vadd.f32 %v2593, %v2509
  %v2678 = vadd.f32 %v2594, %v2510
  %v2679 = vadd.f32 %v2595, %v2511
  %v2680 = vadd.f32 %v2596, %v2512
  %v2681 = vadd.f32 %v2597, %v2513
  %v2682 = vadd.f32 %v2598, %v2514
  %v2683 = vadd.f32 %v2599, %v2515
  %v2684 = vadd.f32 %v2600, %v2516
  %v2685 = vadd.f32 %v2601, %v2517
  %v2686 = vadd.f32 %v2602, %v2518
  %v2687 = vadd.f32 %v2603, %v2519
  %v2688 = vadd.f32 %v2604, %v2520
  %v2689 = vadd.f32 %v2605, %v2521
  %v2690 = vadd.f32 %v2606, %v2522
  %v2691 = vadd.f32 %v2607, %v2523
  %v2692 = vadd.f32 %v2608, %v2524
  %v2693 = vadd.f32 %v2609, %v2525
  %v2694 = vadd.f32 %v2610, %v2526
  %v2695 = vadd.f32 %v2611, %v2527
  %v2696 = vadd.f32 %v2612, %v2528
  %v2697 = vadd.f32 %v2613, %v2529
  %v2698 = vadd.f32 %v2614, %v2530
  %v2699 = vadd.f32 %v2615, %v2531
  %v2700 = vadd.f32 %v2616, %v2532
  %v2701 = vadd.f32 %v2617, %v2533
  %v2702 = vadd.f32 %v2618, %v2534
  %v2703 = vadd.f32 %v2619, %v2535
  %v2704 = vadd.f32 %v2620, %v2536
  %v2705 = vadd.f32 %v2621, %v2537
  %v2706 = vadd.f32 %v2622, %v2538
  %v2707 = vadd.f32 %v2623, %v2539
  %v2708 = vadd.f32 %v2624, %v2540
  %v2709 = vadd.f32 %v2625, %v2541
  %v2710 = vadd.f32 %v2626, %v2542
  %v2711 = vadd.f32 %v2627, %v2543
  %v2712 = vadd.f32 %v2628, %v2544
  %v2713 = vadd.f32 %v2629, %v2545
  %v2714 = vadd.f32 %v2630, %v2546
  %v2715 = vadd.f32 %v2631, %v2547
  %v2716 = vadd.f32 %v2632, %v2548
  %v2717 = vadd.f32 %v2633, %v2549
  %v2718 = vadd.f32 %v2634, %v2550
  %v2719 = vadd.f32 %v2635, %v2551
  %v2720 = vadd.f32 %v2636, %v2552
  %v2721 = vadd.f32 %v2637, %v2553
  %v2722 = vadd.f32 %v2638, %v2554
  %v2723 = vadd.f32 %v2639, %v2555
  %v2724 = vadd.f32 %v2640, %v2556
  %v2725 = vadd.f32 %v2641, %v2557
  %v2726 = vadd.f32 %v2642, %v2558
  %v2727 = vadd.f32 %v2643, %v2559
  %v2728 = vadd.f32 %v2644, %v2560
  %v2729 = vadd.f32 %v2645, %v2561
  %v2730 = vadd.f32 %v2646, %v2562
  %v2731 = vadd.f32 %v2647, %v2563
  %v2732 = vadd.f32 %v2648, %v2564
  %v2733 = vadd.f32 %v2649, %v2565
  %v2734 = vadd.f32 %v2650, %v2566
  %v2735 = vadd.f32 %v2651, %v2567
  %v2736 = vadd.f32 %v2652, %v2568
  %v2737 = vadd.f32 %v2653, %v2569
  %v2738 = vadd.f32 %v2654, %v2570
  %v2739 = vadd.f32 %v2655, %v2571
  %v2740 = vadd.f32 %v2656, %v2572
  %v2741 = vadd.f32 %v2657, %v2573
  %v2742 = vadd.f32 %v2658, %v2574
  %v2743 = vadd.f32 %v2659, %v2575
  %v2744 = vadd.f32 %v2660, %v2576
  %v2745 = vadd.f32 %v2661, %v2577
  %v2746 = vadd.f32 %v2662, %v2578
  %v2747 = vadd.f32 %v2663, %v2579
  %v2748 = vadd.f32 %v2664, %v2580
  %v2749 = vadd.f32 %v2665, %v2581
  %v2750 = vadd.f32 %v2666, %v2582
  %v2751 = vadd.f32 %v2667, %v2583
  %v2752 = vadd.f32 %v2668, %v2584
  %v2753 = vmax.f32 %v2669, 0.0
  %v2754 = vmax.f32 %v2670, 0.0
  %v2755 = vmax.f32 %v2671, 0.0
  %v2756 = vmax.f32 %v2672, 0.0
  %v2757 = vmax.f32 %v2673, 0.0
  %v2758 = vmax.f32 %v2674, 0.0
  %v2759 = vmax.f32 %v2675, 0.0
  %v2760 = vmax.f32 %v2676, 0.0
  %v2761 = vmax.f32 %v2677, 0.0
  %v2762 = vmax.f32 %v2678, 0.0
  %v2763 = vmax.f32 %v2679, 0.0
  %v2764 = vmax.f32 %v2680, 0.0
  %v2765 = vmax.f32 %v2681, 0.0
  %v2766 = vmax.f32 %v2682, 0.0
  %v2767 = vmax.f32 %v2683, 0.0
  %v2768 = vmax.f32 %v2684, 0.0
  %v2769 = vmax.f32 %v2685, 0.0
  %v2770 = vmax.f32 %v2686, 0.0
  %v2771 = vmax.f32 %v2687, 0.0
  %v2772 = vmax.f32 %v2688, 0.0
  %v2773 = vmax.f32 %v2689, 0.0
  %v2774 = vmax.f32 %v2690, 0.0
  %v2775 = vmax.f32 %v2691, 0.0
  %v2776 = vmax.f32 %v2692, 0.0
  %v2777 = vmax.f32 %v2693, 0.0
  %v2778 = vmax.f32 %v2694, 0.0
  %v2779 = vmax.f32 %v2695, 0.0
  %v2780 = vmax.f32 %v2696, 0.0
  %v2781 = vmax.f32 %v2697, 0.0
  %v2782 = vmax.f32 %v2698, 0.0
  %v2783 = vmax.f32 %v2699, 0.0
  %v2784 = vmax.f32 %v2700, 0.0
  %v2785 = vmax.f32 %v2701, 0.0
  %v2786 = vmax.f32 %v2702, 0.0
  %v2787 = vmax.f32 %v2703, 0.0
  %v2788 = vmax.f32 %v2704, 0.0
  %v2789 = vmax.f32 %v2705, 0.0
  %v2790 = vmax.f32 %v2706, 0.0
  %v2791 = vmax.f32 %v2707, 0.0
  %v2792 = vmax.f32 %v2708, 0.0
  %v2793 = vmax.f32 %v2709, 0.0
  %v2794 = vmax.f32 %v2710, 0.0
  %v2795 = vmax.f32 %v2711, 0.0
  %v2796 = vmax.f32 %v2712, 0.0
  %v2797 = vmax.f32 %v2713, 0.0
  %v2798 = vmax.f32 %v2714, 0.0
  %v2799 = vmax.f32 %v2715, 0.0
  %v2800 = vmax.f32 %v2716, 0.0
  %v2801 = vmax.f32 %v2717, 0.0
  %v2802 = vmax.f32 %v2718, 0.0
  %v2803 = vmax.f32 %v2719, 0.0
  %v2804 = vmax.f32 %v2720, 0.0
  %v2805 = vmax.f32 %v2721, 0.0
  %v2806 = vmax.f32 %v2722, 0.0
  %v2807 = vmax.f32 %v2723, 0.0
  %v2808 = vmax.f32 %v2724, 0.0
  %v2809 = vmax.f32 %v2725, 0.0
  %v2810 = vmax.f32 %v2726, 0.0
  %v2811 = vmax.f32 %v2727, 0.0
  %v2812 = vmax.f32 %v2728, 0.0
  %v2813 = vmax.f32 %v2729, 0.0
  %v2814 = vmax.f32 %v2730, 0.0
  %v2815 = vmax.f32 %v2731, 0.0
  %v2816 = vmax.f32 %v2732, 0.0
  %v2817 = vmax.f32 %v2733, 0.0
  %v2818 = vmax.f32 %v2734, 0.0
  %v2819 = vmax.f32 %v2735, 0.0
  %v2820 = vmax.f32 %v2736, 0.0
  %v2821 = vmax.f32 %v2737, 0.0
  %v2822 = vmax.f32 %v2738, 0.0
  %v2823 = vmax.f32 %v2739, 0.0
  %v2824 = vmax.f32 %v2740, 0.0
  %v2825 = vmax.f32 %v2741, 0.0
  %v2826 = vmax.f32 %v2742, 0.0
  %v2827 = vmax.f32 %v2743, 0.0
  %v2828 = vmax.f32 %v2744, 0.0
  %v2829 = vmax.f32 %v2745, 0.0
  %v2830 = vmax.f32 %v2746, 0.0
  %v2831 = vmax.f32 %v2747, 0.0
  %v2832 = vmax.f32 %v2748, 0.0
  %v2833 = vmax.f32 %v2749, 0.0
  %v2834 = vmax.f32 %v2750, 0.0
  %v2835 = vmax.f32 %v2751, 0.0
  %v2836 = vmax.f32 %v2752, 0.0
  %2837 = vst [vmem:[%s4] sm:$0xff] %v2753
  %2838 = vst.msk [vmem:[%s4 + $0x8] sm:$0xff] %vm1324, %v2754
  %2839 = vst [vmem:[%s4 + $0x10] sm:$0xff] %v2755
  %2840 = vst.msk [vmem:[%s4 + $0x18] sm:$0xff] %vm1324, %v2756
  %2841 = vst [vmem:[%s4 + $0x20] sm:$0xff] %v2757
  %2842 = vst.msk [vmem:[%s4 + $0x28] sm:$0xff] %vm1324, %v2758
  %2843 = vst [vmem:[%s4 + $0x30] sm:$0xff] %v2759
  %2844 = vst.msk [vmem:[%s4 + $0x38] sm:$0xff] %vm1324, %v2760
  %2845 = vst [vmem:[%s4 + $0x40] sm:$0xff] %v2761
  %2846 = vst.msk [vmem:[%s4 + $0x48] sm:$0xff] %vm1324, %v2762
  %2847 = vst [vmem:[%s4 + $0x50] sm:$0xff] %v2763
  %2848 = vst.msk [vmem:[%s4 + $0x58] sm:$0xff] %vm1324, %v2764
  %2849 = vst [vmem:[%s4 + $0x60] sm:$0xff] %v2765
  %2850 = vst.msk [vmem:[%s4 + $0x68] sm:$0xff] %vm1324, %v2766
  %2851 = vst [vmem:[%s4 + $0x70] sm:$0xff] %v2767
  %2852 = vst.msk [vmem:[%s4 + $0x78] sm:$0xff] %vm1324, %v2768
  %2853 = vst [vmem:[%s4 + $0x80] sm:$0xff] %v2769
  %2854 = vst.msk [vmem:[%s4 + $0x88] sm:$0xff] %vm1324, %v2770
  %2855 = vst [vmem:[%s4 + $0x90] sm:$0xff] %v2771
  %2856 = vst.msk [vmem:[%s4 + $0x98] sm:$0xff] %vm1324, %v2772
  %2857 = vst [vmem:[%s4 + $0xa0] sm:$0xff] %v2773
  %2858 = vst.msk [vmem:[%s4 + $0xa8] sm:$0xff] %vm1324, %v2774
  %2859 = vst [vmem:[%s4 + $0xb0] sm:$0xff] %v2775
  %2860 = vst.msk [vmem:[%s4 + $0xb8] sm:$0xff] %vm1324, %v2776
  %2861 = vst [vmem:[%s4 + $0xc0] sm:$0xff] %v2777
  %2862 = vst.msk [vmem:[%s4 + $0xc8] sm:$0xff] %vm1324, %v2778
  %2863 = vst [vmem:[%s4 + $0xd0] sm:$0xff] %v2779
  %2864 = vst.msk [vmem:[%s4 + $0xd8] sm:$0xff] %vm1324, %v2780
  %2865 = vst [vmem:[%s4 + $0xe0] sm:$0xff] %v2781
  %2866 = vst.msk [vmem:[%s4 + $0xe8] sm:$0xff] %vm1324, %v2782
  %2867 = vst [vmem:[%s4 + $0xf0] sm:$0xff] %v2783
  %2868 = vst.msk [vmem:[%s4 + $0xf8] sm:$0xff] %vm1324, %v2784
  %2869 = vst [vmem:[%s4 + $0x100] sm:$0xff] %v2785
  %2870 = vst.msk [vmem:[%s4 + $0x108] sm:$0xff] %vm1324, %v2786
  %2871 = vst [vmem:[%s4 + $0x110] sm:$0xff] %v2787
  %2872 = vst.msk [vmem:[%s4 + $0x118] sm:$0xff] %vm1324, %v2788
  %2873 = vst [vmem:[%s4 + $0x120] sm:$0xff] %v2789
  %2874 = vst.msk [vmem:[%s4 + $0x128] sm:$0xff] %vm1324, %v2790
  %2875 = vst [vmem:[%s4 + $0x130] sm:$0xff] %v2791
  %2876 = vst.msk [vmem:[%s4 + $0x138] sm:$0xff] %vm1324, %v2792
  %2877 = vst [vmem:[%s4 + $0x140] sm:$0xff] %v2793
  %2878 = vst.msk [vmem:[%s4 + $0x148] sm:$0xff] %vm1324, %v2794
  %2879 = vst [vmem:[%s4 + $0x150] sm:$0xff] %v2795
  %2880 = vst.msk [vmem:[%s4 + $0x158] sm:$0xff] %vm1324, %v2796
  %2881 = vst [vmem:[%s4 + $0x160] sm:$0xff] %v2797
  %2882 = vst.msk [vmem:[%s4 + $0x168] sm:$0xff] %vm1324, %v2798
  %2883 = vst [vmem:[%s4 + $0x170] sm:$0xff] %v2799
  %2884 = vst.msk [vmem:[%s4 + $0x178] sm:$0xff] %vm1324, %v2800
  %2885 = vst [vmem:[%s4 + $0x180] sm:$0xff] %v2801
  %2886 = vst.msk [vmem:[%s4 + $0x188] sm:$0xff] %vm1324, %v2802
  %2887 = vst [vmem:[%s4 + $0x190] sm:$0xff] %v2803
  %2888 = vst.msk [vmem:[%s4 + $0x198] sm:$0xff] %vm1324, %v2804
  %2889 = vst [vmem:[%s4 + $0x1a0] sm:$0xff] %v2805
  %2890 = vst.msk [vmem:[%s4 + $0x1a8] sm:$0xff] %vm1324, %v2806
  %2891 = vst [vmem:[%s4 + $0x1b0] sm:$0xff] %v2807
  %2892 = vst.msk [vmem:[%s4 + $0x1b8] sm:$0xff] %vm1324, %v2808
  %2893 = vst [vmem:[%s4 + $0x1c0] sm:$0xff] %v2809
  %2894 = vst.msk [vmem:[%s4 + $0x1c8] sm:$0xff] %vm1324, %v2810
  %2895 = vst [vmem:[%s4 + $0x1d0] sm:$0xff] %v2811
  %2896 = vst.msk [vmem:[%s4 + $0x1d8] sm:$0xff] %vm1324, %v2812
  %2897 = vst [vmem:[%s4 + $0x1e0] sm:$0xff] %v2813
  %2898 = vst.msk [vmem:[%s4 + $0x1e8] sm:$0xff] %vm1324, %v2814
  %2899 = vst [vmem:[%s4 + $0x1f0] sm:$0xff] %v2815
  %2900 = vst.msk [vmem:[%s4 + $0x1f8] sm:$0xff] %vm1324, %v2816
  %2901 = vst [vmem:[%s4 + $0x200] sm:$0xff] %v2817
  %2902 = vst.msk [vmem:[%s4 + $0x208] sm:$0xff] %vm1324, %v2818
  %2903 = vst [vmem:[%s4 + $0x210] sm:$0xff] %v2819
  %2904 = vst.msk [vmem:[%s4 + $0x218] sm:$0xff] %vm1324, %v2820
  %2905 = vst [vmem:[%s4 + $0x220] sm:$0xff] %v2821
  %2906 = vst.msk [vmem:[%s4 + $0x228] sm:$0xff] %vm1324, %v2822
  %2907 = vst [vmem:[%s4 + $0x230] sm:$0xff] %v2823
  %2908 = vst.msk [vmem:[%s4 + $0x238] sm:$0xff] %vm1324, %v2824
  %2909 = vst [vmem:[%s4 + $0x240] sm:$0xff] %v2825
  %2910 = vst.msk [vmem:[%s4 + $0x248] sm:$0xff] %vm1324, %v2826
  %2911 = vst [vmem:[%s4 + $0x250] sm:$0xff] %v2827
  %2912 = vst.msk [vmem:[%s4 + $0x258] sm:$0xff] %vm1324, %v2828
  %2913 = vst [vmem:[%s4 + $0x260] sm:$0xff] %v2829
  %2914 = vst.msk [vmem:[%s4 + $0x268] sm:$0xff] %vm1324, %v2830
  %2915 = vst [vmem:[%s4 + $0x270] sm:$0xff] %v2831
  %2916 = vst.msk [vmem:[%s4 + $0x278] sm:$0xff] %vm1324, %v2832
  %2917 = vst [vmem:[%s4 + $0x280] sm:$0xff] %v2833
  %2918 = vst.msk [vmem:[%s4 + $0x288] sm:$0xff] %vm1324, %v2834
  %2919 = vst [vmem:[%s4 + $0x290] sm:$0xff] %v2835
  %2920 = vst.msk [vmem:[%s4 + $0x298] sm:$0xff] %vm1324, %v2836
  // Predicated region
  $region18: #{tpu_custom_call.1} parent=0 // pred_check
    _
  $region19: #{tpu_custom_call.1} parent=0 // pred_check_branch
    %2922 = sbr.rel (0) target = $region21
  $region20: #{tpu_custom_call.1} parent=0 // pred_region
    _
  $region21: #{tpu_custom_call.1} parent=0 // pred_fallthru
    _
  // Predicated region
  $region22: #{tpu_custom_call.1} parent=0 // pred_check
    _
  $region23: #{tpu_custom_call.1} parent=0 // pred_check_branch
    %2924 = sbr.rel (0) target = $region25
  $region24: #{tpu_custom_call.1} parent=0 // pred_region
    _
  $region25: #{tpu_custom_call.1} parent=0 // pred_fallthru
    _

</llo_original>
